<compile_context>
chip_gen: v7x
topology: tpu7x:2x2x1
jax: 0.10.0
libtpu: 0.0.40
codegen_flags: <defaults>
</compile_context>

<pallas_src>
import functools
import math

import jax
import jax.numpy as jnp
from jax.experimental import pallas as pl
from jax.experimental.pallas import tpu as pltpu


def _silu(v):
    return v * jax.nn.sigmoid(v)


def _round_up(n, m):
    return ((n + m - 1) // m) * m


def graphconv_kernel(a_ref, dis_ref, y_ref, t_ref,
                     bg_ref, wt_ref, bt_ref,
                     wl_ref, bl_ref, g2_ref, b2_ref,
                     o_ref, *, cout, mm_dtype):
    # int8 (A+I) row slab -> bf16/f32 right before the MXU.  The cast is VPU
    # filler hidden under the adjacency DMA.
    # TODO(synk): on v7x an fp8(e4m3) adjacency copy would avoid this upcast
    # while keeping 1 byte/entry (v7x MXU has no integer path).
    a = a_ref[...].astype(mm_dtype)

    # Normalized aggregation + fused GCN projection:
    #   rows of D^-1/2 (A+I) D^-1/2 X Wg  ==  dis_tile * ( (A+I)_tile @ Y )
    # with Y = (D^-1/2 X) @ Wg precomputed in glue.  f32 accumulation.
    agg = jnp.dot(a, y_ref[...], preferred_element_type=jnp.float32)
    h = _silu(dis_ref[...] * agg + bg_ref[...])

    # time embedding: SiLU(t @ Wt + bt), added per node
    h = h + _silu(jnp.dot(t_ref[...].astype(mm_dtype), wt_ref[...],
                          preferred_element_type=jnp.float32) + bt_ref[...])

    # lin + SiLU (low-precision operands, f32 accumulation)
    z = _silu(jnp.dot(h.astype(mm_dtype), wl_ref[...],
                      preferred_element_type=jnp.float32) + bl_ref[...])

    # LayerNorm over the *real* cout channels.  Padded lanes of z are exactly
    # zero (padded weight columns / biases are zero), so sums over all cp lanes
    # already equal the real-channel sums -> no lane mask / iota needed.
    inv_c = 1.0 / float(cout)
    mu = jnp.sum(z, axis=-1, keepdims=True) * inv_c
    var = jnp.sum(z * z, axis=-1, keepdims=True) * inv_c - mu * mu
    zn = (z - mu) * jax.lax.rsqrt(var + 1e-5)
    # padded lanes of g2/b2 are zero -> padded output lanes are exactly 0.
    o_ref[...] = zn * g2_ref[...] + b2_ref[...]


def _vmem_capacity_bytes():
    """Generation-aware VMEM capacity (64 MiB/TC on v7x, 128 MiB on v5e/v6e)."""
    try:
        cap = getattr(pltpu.get_tpu_info(), "vmem_capacity_bytes", None)
        if cap:
            return int(cap)
    except Exception:
        pass
    return 64 << 20          # conservative default (v7x per-TC figure)


def _pick_block_rows(n_nodes, adj_itemsize, slab_budget):
    """Largest row tile (multiple of 128 so padded N stays lane-aligned) such
    that: the double-buffered int8 adjacency slab fits the budget, the grid has
    >= 2 steps (so "parallel" actually shards across both v7x TensorCores), and
    the row padding stays modest.  Never falls back to tm = N."""
    for tm in (1024, 512, 256, 128):
        n_pad = _round_up(n_nodes, tm)
        if 2 * tm * n_pad * adj_itemsize > slab_budget:
            continue
        if n_pad // tm < 2 and n_nodes > 128:
            continue
        if n_pad - n_nodes > max(n_nodes // 4, 127):
            continue
        return tm
    return 128


def build_graph(edge_index, num_nodes, num_nodes_padded):
    """Dense (A+I) as int8 plus the D^-1/2 vector (gcn_norm), zero-padded to
    num_nodes_padded rows/cols.  Depends only on edge_index -> cache and reuse
    across layers / diffusion timesteps instead of rebuilding every forward.
    TODO(synk): for large sparse graphs replace this dense O(N^2) adjacency with
    a scalar-prefetched edge-list segment-sum over Y (O(E*cp) traffic)."""
    src, dst = edge_index[0], edge_index[1]
    a = jnp.zeros((num_nodes_padded, num_nodes_padded), jnp.float32)
    a = a.at[dst, src].add(1.0)
    idx = jnp.arange(num_nodes)
    a = a.at[idx, idx].add(1.0)                       # self loops (real nodes only)
    deg = jnp.sum(a, axis=1)
    dis = jnp.where(deg > 0, jax.lax.rsqrt(deg), 0.0)  # padded rows -> 0
    # (A+I) entries are small non-negative integers -> exact in int8.
    return a.astype(jnp.int8), dis.astype(jnp.float32)


def graph_conv_forward(x, edge_index, t, params, *, use_bf16=True,
                       block_rows=None, graph=None, return_padded=False):
    """x: [N, Cin] f32, edge_index: [2, E] int32 (row 0 = source, row 1 = target),
    t: [N, Tdim] f32.  Returns [N, Cout] f32 (or [N, cp] with the lane-dense
    channel padding kept when return_padded=True, for chaining padded layers)."""
    N, cin = x.shape
    cout = params["wg"].shape[1]
    tdim = t.shape[1]
    cp = _round_up(cout, 128)                 # lane-dense padded channel width
    mm_dtype = jnp.bfloat16 if use_bf16 else jnp.float32

    vmem_cap = _vmem_capacity_bytes()
    if block_rows is not None:
        tm = block_rows
        assert tm % 32 == 0, "block_rows must be a multiple of 32 (int8 sublane tiling)"
    else:
        tm = _pick_block_rows(N, jnp.dtype(jnp.int8).itemsize,
                              slab_budget=int(0.375 * vmem_cap))
    n_pad = _round_up(N, tm)
    grid = (n_pad // tm,)

    # ---- graph operands (cacheable across calls: depend only on edge_index) ----
    if graph is None:
        graph = build_graph(edge_index, N, n_pad)
    a_i8, dis = graph
    assert a_i8.shape == (n_pad, n_pad) and dis.shape == (n_pad,)
    dis_col = dis[:, None]

    # ---- glue: fuse the GCN projection -> Y = (D^-1/2 x) @ Wg, lane-dense ----
    def pad_w(w):
        return jnp.pad(w, ((0, 0), (0, cp - w.shape[1])))

    def pad_b(v):
        return jnp.pad(v, (0, cp - v.shape[0])).reshape(1, cp).astype(jnp.float32)

    x_p = jnp.pad(x, ((0, n_pad - N), (0, 0))).astype(jnp.float32)
    y = ((dis_col * x_p) @ pad_w(params["wg"]).astype(jnp.float32)).astype(mm_dtype)

    wt = pad_w(params["wt"]).astype(mm_dtype)
    wl = jnp.pad(params["wl"], ((0, cp - params["wl"].shape[0]),
                                (0, cp - params["wl"].shape[1]))).astype(mm_dtype)
    bg, bt, bl = pad_b(params["bg"]), pad_b(params["bt"]), pad_b(params["bl"])
    g2, b2 = pad_b(params["g2"]), pad_b(params["b2"])
    t_p = jnp.pad(t, ((0, n_pad - N), (0, 0))).astype(jnp.float32)

    def rows(shape):          # blocked along the node axis
        return pl.BlockSpec(shape, lambda i: (i, 0))

    def full(arr):            # resident (revisited) across all grid steps
        return pl.BlockSpec(arr.shape, lambda i: (0, 0))

    in_arrays = (a_i8, dis_col, y, t_p, bg, wt, bt, wl, bl, g2, b2)
    in_specs = [
        rows((tm, n_pad)),        # int8 adjacency row slab (dominant HBM stream)
        rows((tm, 1)),            # D^-1/2 for this node tile (f32)
        full(y),                  # fused (D^-1/2 x) @ Wg, resident
        rows((tm, tdim)),         # time embedding rows
        full(bg), full(wt), full(bt),
        full(wl), full(bl), full(g2), full(b2),
    ]
    out_spec = rows((tm, cp))

    # ---- VMEM budget: 2x double-buffered blocks + 1x residents + kernel temps ----
    def nbytes(shape, dt):
        return math.prod(shape) * jnp.dtype(dt).itemsize

    dbuf = (nbytes((tm, n_pad), jnp.int8) + nbytes((tm, 1), jnp.float32)
            + nbytes((tm, tdim), jnp.float32) + nbytes((tm, cp), jnp.float32))
    resident = (nbytes(y.shape, mm_dtype) + nbytes(wt.shape, mm_dtype)
                + nbytes(wl.shape, mm_dtype) + 5 * nbytes((1, cp), jnp.float32))
    temps = 5 * nbytes((tm, cp), jnp.float32)     # agg/h/z/zn f32 intermediates
    vmem_limit = int(min(max(2 * dbuf + resident + temps + (4 << 20), 16 << 20),
                         int(0.75 * vmem_cap)))

    out_padded = pl.pallas_call(
        functools.partial(graphconv_kernel, cout=cout, mm_dtype=mm_dtype),
        out_shape=jax.ShapeDtypeStruct((n_pad, cp), jnp.float32),
        grid=grid,
        in_specs=in_specs,
        out_specs=out_spec,
        compiler_params=pltpu.CompilerParams(
            dimension_semantics=("parallel",),
            vmem_limit_bytes=vmem_limit),
    )(*in_arrays)

    if return_padded:
        return out_padded[:N]     # keep lane-dense channel padding for next layer
    return out_padded[:N, :cout]


def _reference(x, edge_index, t, params):
    """Pure-JAX reference for correctness check (matches the PyTorch forward)."""
    N = x.shape[0]
    src, dst = edge_index[0], edge_index[1]
    A = jnp.zeros((N, N), jnp.float32).at[dst, src].add(1.0) + jnp.eye(N)
    deg = A.sum(axis=1)
    dis = jnp.where(deg > 0, 1.0 / jnp.sqrt(deg), 0.0)
    ahat = dis[:, None] * A * dis[None, :]
    h = _silu(ahat @ (x @ params["wg"]) + params["bg"])
    h = h + _silu(t @ params["wt"] + params["bt"])
    z = _silu(h @ params["wl"] + params["bl"])
    mu = z.mean(-1, keepdims=True)
    var = ((z - mu) ** 2).mean(-1, keepdims=True)
    return (z - mu) / jnp.sqrt(var + 1e-5) * params["g2"] + params["b2"]


if __name__ == "__main__":
    N, Cin, Cout, Tdim = 256, 16, 32, 32

    key = jax.random.PRNGKey(0)
    keys = jax.random.split(key, 8)

    # deterministic parameter init (synthetic; shapes match the PyTorch module)
    params = {
        "wg": jax.random.normal(keys[0], (Cin, Cout), jnp.float32) * 0.2,   # GCNConv weight
        "bg": jax.random.normal(keys[1], (Cout,), jnp.float32) * 0.1,       # GCNConv bias
        "wt": jax.random.normal(keys[2], (Tdim, Cout), jnp.float32) * 0.2,  # time_mlp
        "bt": jax.random.normal(keys[3], (Cout,), jnp.float32) * 0.1,
        "wl": jax.random.normal(keys[4], (Cout, Cout), jnp.float32) * 0.2,  # lin
        "bl": jax.random.normal(keys[5], (Cout,), jnp.float32) * 0.1,
        "g2": jnp.ones((Cout,), jnp.float32),                               # layer_norm2 weight
        "b2": jnp.zeros((Cout,), jnp.float32),                              # layer_norm2 bias
    }

    # inputs
    x = jax.random.normal(keys[6], (N, Cin), jnp.float32)
    t = jax.random.normal(keys[7], (N, Tdim), jnp.float32)
    # deterministic ring graph, both directions -> 2N edges
    idx = jnp.arange(N, dtype=jnp.int32)
    src = jnp.concatenate([idx, (idx + 1) % N])
    dst = jnp.concatenate([(idx + 1) % N, idx])
    edge_index = jnp.stack([src, dst], axis=0)

    ref = _reference(x, edge_index, t, params)

    # f32 operand path (tight tolerance); int8 adjacency, tiled & pipelined grid.
    out32 = graph_conv_forward(x, edge_index, t, params, use_bf16=False)
    out32 = jax.block_until_ready(out32)
    assert out32.shape == (N, Cout)
    assert jnp.allclose(out32, ref, atol=1e-3, rtol=1e-3), "f32 mismatch vs reference"

    # default path: bf16 MXU operands + int8 adjacency (f32 accumulation / LN).
    out_bf16 = graph_conv_forward(x, edge_index, t, params)
    out_bf16 = jax.block_until_ready(out_bf16)
    assert out_bf16.shape == (N, Cout)
    assert jnp.allclose(out_bf16, ref, atol=5e-2, rtol=5e-2), "bf16 mismatch vs reference"

    # TODO(synk): NNConv/GATConv branches (edge_attr path, attention=True) are
    # unused in this forward configuration and are not implemented.
    print("KERNEL_OK")
</pallas_src>

<mosaic_0001>
module attributes {stable_mosaic.version = 11 : i64} {
  func.func @graphconv_kernel(%arg0: i32, %arg1: memref<128x256xi8, #tpu.memory_space<vmem>>, %arg2: memref<128x1xf32, #tpu.memory_space<vmem>>, %arg3: memref<256x128xf32, #tpu.memory_space<vmem>>, %arg4: memref<128x32xf32, #tpu.memory_space<vmem>>, %arg5: memref<1x128xf32, #tpu.memory_space<vmem>>, %arg6: memref<32x128xf32, #tpu.memory_space<vmem>>, %arg7: memref<1x128xf32, #tpu.memory_space<vmem>>, %arg8: memref<128x128xf32, #tpu.memory_space<vmem>>, %arg9: memref<1x128xf32, #tpu.memory_space<vmem>>, %arg10: memref<1x128xf32, #tpu.memory_space<vmem>>, %arg11: memref<1x128xf32, #tpu.memory_space<vmem>>, %arg12: memref<128x128xf32, #tpu.memory_space<vmem>>) attributes {dimension_semantics = [#tpu.dimension_semantics<parallel>], iteration_bounds = array<i64: 2>, scalar_prefetch = 0 : i64, scratch_operands = 0 : i64, tpu.core_type = #tpu.core_type<tc>, window_params = [{transform_indices = @transform_0, window_bounds = array<i64: 128, 256>}, {transform_indices = @transform_1, window_bounds = array<i64: 128, 1>}, {pipeline_mode = #tpu.pipeline_mode<synchronous>, transform_indices = @transform_2, window_bounds = array<i64: 256, 128>}, {transform_indices = @transform_3, window_bounds = array<i64: 128, 32>}, {pipeline_mode = #tpu.pipeline_mode<synchronous>, transform_indices = @transform_4, window_bounds = array<i64: 1, 128>}, {pipeline_mode = #tpu.pipeline_mode<synchronous>, transform_indices = @transform_5, window_bounds = array<i64: 32, 128>}, {pipeline_mode = #tpu.pipeline_mode<synchronous>, transform_indices = @transform_6, window_bounds = array<i64: 1, 128>}, {pipeline_mode = #tpu.pipeline_mode<synchronous>, transform_indices = @transform_7, window_bounds = array<i64: 128, 128>}, {pipeline_mode = #tpu.pipeline_mode<synchronous>, transform_indices = @transform_8, window_bounds = array<i64: 1, 128>}, {pipeline_mode = #tpu.pipeline_mode<synchronous>, transform_indices = @transform_9, window_bounds = array<i64: 1, 128>}, {pipeline_mode = #tpu.pipeline_mode<synchronous>, transform_indices = @transform_10, window_bounds = array<i64: 1, 128>}, {transform_indices = @transform_11, window_bounds = array<i64: 128, 128>}]} {
    %c0 = arith.constant 0 : index
    %c0_0 = arith.constant 0 : index
    %0 = vector.load %arg1[%c0, %c0_0] : memref<128x256xi8, #tpu.memory_space<vmem>>, vector<128x256xi8>
    %1 = arith.sitofp %0 : vector<128x256xi8> to vector<128x256xf32>
    %c0_1 = arith.constant 0 : index
    %c0_2 = arith.constant 0 : index
    %2 = vector.load %arg3[%c0_1, %c0_2] : memref<256x128xf32, #tpu.memory_space<vmem>>, vector<256x128xf32>
    %cst = arith.constant dense<0.000000e+00> : vector<128x128xf32>
    %3 = tpu.matmul %1, %2, %cst {dimension_numbers = #tpu.dot_dimension_numbers<[1], [0], [0], [1], [0, 0, 1, 1], [], []>} : vector<128x256xf32>, vector<256x128xf32>, vector<128x128xf32> -> vector<128x128xf32>
    %c0_3 = arith.constant 0 : index
    %c0_4 = arith.constant 0 : index
    %4 = vector.load %arg2[%c0_3, %c0_4] : memref<128x1xf32, #tpu.memory_space<vmem>>, vector<128x1xf32>
    %5 = vector.broadcast %4 : vector<128x1xf32> to vector<128x128xf32>
    %6 = arith.mulf %5, %3 : vector<128x128xf32>
    %c0_5 = arith.constant 0 : index
    %c0_6 = arith.constant 0 : index
    %7 = vector.load %arg5[%c0_5, %c0_6] : memref<1x128xf32, #tpu.memory_space<vmem>>, vector<1x128xf32>
    %8 = vector.broadcast %7 : vector<1x128xf32> to vector<128x128xf32>
    %9 = arith.addf %6, %8 : vector<128x128xf32>
    %10 = arith.negf %9 : vector<128x128xf32>
    %11 = math.exp %10 : vector<128x128xf32>
    %cst_7 = arith.constant 1.000000e+00 : f32
    %12 = vector.broadcast %cst_7 : f32 to vector<128x128xf32>
    %13 = arith.addf %12, %11 : vector<128x128xf32>
    %14 = arith.divf %12, %13 : vector<128x128xf32>
    %15 = arith.mulf %9, %14 : vector<128x128xf32>
    %c0_8 = arith.constant 0 : index
    %c0_9 = arith.constant 0 : index
    %16 = vector.load %arg4[%c0_8, %c0_9] : memref<128x32xf32, #tpu.memory_space<vmem>>, vector<128x32xf32>
    %c0_10 = arith.constant 0 : index
    %c0_11 = arith.constant 0 : index
    %17 = vector.load %arg6[%c0_10, %c0_11] : memref<32x128xf32, #tpu.memory_space<vmem>>, vector<32x128xf32>
    %cst_12 = arith.constant dense<0.000000e+00> : vector<128x128xf32>
    %18 = tpu.matmul %16, %17, %cst_12 {dimension_numbers = #tpu.dot_dimension_numbers<[1], [0], [0], [1], [0, 0, 1, 1], [], []>} : vector<128x32xf32>, vector<32x128xf32>, vector<128x128xf32> -> vector<128x128xf32>
    %c0_13 = arith.constant 0 : index
    %c0_14 = arith.constant 0 : index
    %19 = vector.load %arg7[%c0_13, %c0_14] : memref<1x128xf32, #tpu.memory_space<vmem>>, vector<1x128xf32>
    %20 = vector.broadcast %19 : vector<1x128xf32> to vector<128x128xf32>
    %21 = arith.addf %18, %20 : vector<128x128xf32>
    %22 = arith.negf %21 : vector<128x128xf32>
    %23 = math.exp %22 : vector<128x128xf32>
    %cst_15 = arith.constant 1.000000e+00 : f32
    %24 = vector.broadcast %cst_15 : f32 to vector<128x128xf32>
    %25 = arith.addf %24, %23 : vector<128x128xf32>
    %26 = arith.divf %24, %25 : vector<128x128xf32>
    %27 = arith.mulf %21, %26 : vector<128x128xf32>
    %28 = arith.addf %15, %27 : vector<128x128xf32>
    %c0_16 = arith.constant 0 : index
    %c0_17 = arith.constant 0 : index
    %29 = vector.load %arg8[%c0_16, %c0_17] : memref<128x128xf32, #tpu.memory_space<vmem>>, vector<128x128xf32>
    %cst_18 = arith.constant dense<0.000000e+00> : vector<128x128xf32>
    %30 = tpu.matmul %28, %29, %cst_18 {dimension_numbers = #tpu.dot_dimension_numbers<[1], [0], [0], [1], [0, 0, 1, 1], [], []>} : vector<128x128xf32>, vector<128x128xf32>, vector<128x128xf32> -> vector<128x128xf32>
    %c0_19 = arith.constant 0 : index
    %c0_20 = arith.constant 0 : index
    %31 = vector.load %arg9[%c0_19, %c0_20] : memref<1x128xf32, #tpu.memory_space<vmem>>, vector<1x128xf32>
    %32 = vector.broadcast %31 : vector<1x128xf32> to vector<128x128xf32>
    %33 = arith.addf %30, %32 : vector<128x128xf32>
    %34 = arith.negf %33 : vector<128x128xf32>
    %35 = math.exp %34 : vector<128x128xf32>
    %cst_21 = arith.constant 1.000000e+00 : f32
    %36 = vector.broadcast %cst_21 : f32 to vector<128x128xf32>
    %37 = arith.addf %36, %35 : vector<128x128xf32>
    %38 = arith.divf %36, %37 : vector<128x128xf32>
    %39 = arith.mulf %33, %38 : vector<128x128xf32>
    %cst_22 = arith.constant dense<0.000000e+00> : vector<128xf32>
    %40 = vector.multi_reduction <add>, %39, %cst_22 [1] : vector<128x128xf32> to vector<128xf32>
    %41 = vector.shape_cast %40 : vector<128xf32> to vector<128x1xf32>
    %cst_23 = arith.constant 3.125000e-02 : f32
    %42 = vector.broadcast %cst_23 : f32 to vector<128x1xf32>
    %43 = arith.mulf %41, %42 : vector<128x1xf32>
    %44 = arith.mulf %39, %39 : vector<128x128xf32>
    %cst_24 = arith.constant dense<0.000000e+00> : vector<128xf32>
    %45 = vector.multi_reduction <add>, %44, %cst_24 [1] : vector<128x128xf32> to vector<128xf32>
    %46 = vector.shape_cast %45 : vector<128xf32> to vector<128x1xf32>
    %cst_25 = arith.constant 3.125000e-02 : f32
    %47 = vector.broadcast %cst_25 : f32 to vector<128x1xf32>
    %48 = arith.mulf %46, %47 : vector<128x1xf32>
    %49 = arith.mulf %43, %43 : vector<128x1xf32>
    %50 = arith.subf %48, %49 : vector<128x1xf32>
    %51 = vector.broadcast %43 : vector<128x1xf32> to vector<128x128xf32>
    %52 = arith.subf %39, %51 : vector<128x128xf32>
    %cst_26 = arith.constant 9.99999974E-6 : f32
    %53 = vector.broadcast %cst_26 : f32 to vector<128x1xf32>
    %54 = arith.addf %50, %53 : vector<128x1xf32>
    %55 = math.rsqrt %54 : vector<128x1xf32>
    %56 = vector.broadcast %55 : vector<128x1xf32> to vector<128x128xf32>
    %57 = arith.mulf %52, %56 : vector<128x128xf32>
    %c0_27 = arith.constant 0 : index
    %c0_28 = arith.constant 0 : index
    %58 = vector.load %arg10[%c0_27, %c0_28] : memref<1x128xf32, #tpu.memory_space<vmem>>, vector<1x128xf32>
    %59 = vector.broadcast %58 : vector<1x128xf32> to vector<128x128xf32>
    %60 = arith.mulf %57, %59 : vector<128x128xf32>
    %c0_29 = arith.constant 0 : index
    %c0_30 = arith.constant 0 : index
    %61 = vector.load %arg11[%c0_29, %c0_30] : memref<1x128xf32, #tpu.memory_space<vmem>>, vector<1x128xf32>
    %62 = vector.broadcast %61 : vector<1x128xf32> to vector<128x128xf32>
    %63 = arith.addf %60, %62 : vector<128x128xf32>
    %c0_31 = arith.constant 0 : index
    %c0_32 = arith.constant 0 : index
    %64 = vector.load %arg12[%c0_31, %c0_32] : memref<128x128xf32, #tpu.memory_space<vmem>>, vector<128x128xf32>
    tpu.vector_store %arg12[%c0_31, %c0_32], %63 {strides = array<i32>} : memref<128x128xf32, #tpu.memory_space<vmem>>, vector<128x128xf32>,
    return
  }
  func.func @transform_0(%arg0: i32) -> (i32, i32) {
    %c0_i32 = arith.constant 0 : i32
    %c0_i32_0 = arith.constant 0 : i32
    return %arg0, %c0_i32 : i32, i32
  }
  func.func @transform_1(%arg0: i32) -> (i32, i32) {
    %c0_i32 = arith.constant 0 : i32
    %c0_i32_0 = arith.constant 0 : i32
    return %arg0, %c0_i32 : i32, i32
  }
  func.func @transform_2(%arg0: i32) -> (i32, i32) {
    %c0_i32 = arith.constant 0 : i32
    %c0_i32_0 = arith.constant 0 : i32
    %c0_i32_1 = arith.constant 0 : i32
    return %c0_i32, %c0_i32_0 : i32, i32
  }
  func.func @transform_3(%arg0: i32) -> (i32, i32) {
    %c0_i32 = arith.constant 0 : i32
    %c0_i32_0 = arith.constant 0 : i32
    return %arg0, %c0_i32 : i32, i32
  }
  func.func @transform_4(%arg0: i32) -> (i32, i32) {
    %c0_i32 = arith.constant 0 : i32
    %c0_i32_0 = arith.constant 0 : i32
    %c0_i32_1 = arith.constant 0 : i32
    return %c0_i32, %c0_i32_0 : i32, i32
  }
  func.func @transform_5(%arg0: i32) -> (i32, i32) {
    %c0_i32 = arith.constant 0 : i32
    %c0_i32_0 = arith.constant 0 : i32
    %c0_i32_1 = arith.constant 0 : i32
    return %c0_i32, %c0_i32_0 : i32, i32
  }
  func.func @transform_6(%arg0: i32) -> (i32, i32) {
    %c0_i32 = arith.constant 0 : i32
    %c0_i32_0 = arith.constant 0 : i32
    %c0_i32_1 = arith.constant 0 : i32
    return %c0_i32, %c0_i32_0 : i32, i32
  }
  func.func @transform_7(%arg0: i32) -> (i32, i32) {
    %c0_i32 = arith.constant 0 : i32
    %c0_i32_0 = arith.constant 0 : i32
    %c0_i32_1 = arith.constant 0 : i32
    return %c0_i32, %c0_i32_0 : i32, i32
  }
  func.func @transform_8(%arg0: i32) -> (i32, i32) {
    %c0_i32 = arith.constant 0 : i32
    %c0_i32_0 = arith.constant 0 : i32
    %c0_i32_1 = arith.constant 0 : i32
    return %c0_i32, %c0_i32_0 : i32, i32
  }
  func.func @transform_9(%arg0: i32) -> (i32, i32) {
    %c0_i32 = arith.constant 0 : i32
    %c0_i32_0 = arith.constant 0 : i32
    %c0_i32_1 = arith.constant 0 : i32
    return %c0_i32, %c0_i32_0 : i32, i32
  }
  func.func @transform_10(%arg0: i32) -> (i32, i32) {
    %c0_i32 = arith.constant 0 : i32
    %c0_i32_0 = arith.constant 0 : i32
    %c0_i32_1 = arith.constant 0 : i32
    return %c0_i32, %c0_i32_0 : i32, i32
  }
  func.func @transform_11(%arg0: i32) -> (i32, i32) {
    %c0_i32 = arith.constant 0 : i32
    %c0_i32_0 = arith.constant 0 : i32
    return %arg0, %c0_i32 : i32, i32
  }
}

</mosaic_0001>

<llo_original>
// kernel: tpu_custom_call.1
$region0: #{tpu_custom_call.1}
  #allocation0 [shape = 'u32[]', space=smem, size = 0x4, offset = 0x4, fixed_abs, tag = 'smem constant byte address 0x4 - core index']
  #allocation1 [shape = 'u32[144,128]{1,0:T(1,128)}', space=vmem, size = 0x12000, scoped, tag = 'internal scratch']
  %s0 = inlined_call_operand.vmem [shape: s8[256,256], index: 0, kind: input, shape index: {}]
  %s1 = inlined_call_operand.vmem [shape: f32[256,1], index: 1, kind: input, shape index: {}]
  %s2 = inlined_call_operand.vmem [shape: f32[256,128], index: 2, kind: input, shape index: {}]
  %s3 = inlined_call_operand.vmem [shape: f32[256,32], index: 3, kind: input, shape index: {}]
  %s4 = inlined_call_operand.vmem [shape: f32[1,128], index: 4, kind: input, shape index: {}]
  %s5 = inlined_call_operand.hbm [shape: f32[32,128], index: 5, kind: input, shape index: {}]
  %s6 = inlined_call_operand.vmem [shape: f32[1,128], index: 6, kind: input, shape index: {}]
  %s7 = inlined_call_operand.vmem [shape: f32[128,128], index: 7, kind: input, shape index: {}]
  %s8 = inlined_call_operand.vmem [shape: f32[1,128], index: 8, kind: input, shape index: {}]
  %s9 = inlined_call_operand.vmem [shape: f32[1,128], index: 9, kind: input, shape index: {}]
  %s10 = inlined_call_operand.vmem [shape: f32[1,128], index: 10, kind: input, shape index: {}]
  %s11 = inlined_call_operand.hbm [shape: f32[256,128], index: 11, kind: output, shape index: {}]
  %s12 = sld [smem:[#allocation0]]
  $region81: #{tpu_custom_call.1} parent=0
    _
  %s14 = ssub.s32 1, %s12
  %s15 = scalar_select 0, %s14, %s12
  $region1: #{tpu_custom_call.1} parent=0
    #allocation2 [shape = 'u8[16384]{0}', space=vmem, size = 0x4000, scoped, tag = 'input window, operand 5, single buffered']
    #allocation3 [shape = 's32[2]{0}', space=sflag, size = 0x8, scoped, tag = 'scoped memory for tpu_custom_call.1']
    #allocation4 [shape = 's32[2]{0}', space=sflag, size = 0x8, scoped, tag = 'scoped memory for tpu_custom_call.1']
    #allocation5 [shape = 'u8[131072]{0}', space=vmem, size = 0x20000, scoped, tag = 'output window, operand 0']
    %16 = vsyncpa [#allocation3], 0
    %17 = vsyncpa [#allocation4], 0
    %s18 = scalar_lea.sflag [#allocation4], 1
    %19 = vsyncpa %s18, 0
    loop: start=0, step=1, limit=4
    $region2: #{tpu_custom_call.1} parent=1 // loop_pre_header
      _
    $region3: #{tpu_custom_call.1} parent=1 // loop_header
      %s21 = sphi 0, %s25
      %p22 = scmp.ge.s32.totalorder %s21, 4
      %s31 = sphi 0, %s33
      %s34 = sphi 0, %s31
      %s35 = sphi 0, %s34
      %s51 = sphi 0, %s35
      %s57 = sphi 0, %s59
      %s60 = sphi 0, %s57
      %s61 = sphi 0, %s60
      %s77 = sphi 0, %s61
      %s81 = sphi 0, %s81
      %s83 = sphi 0, %s81
      %s84 = sphi 0, %s83
      %s98 = sphi 0, %s84
      %s104 = sphi 0, %s106
      %s107 = sphi 0, %s104
      %s108 = sphi 0, %s107
      %s124 = sphi 0, %s108
      %s128 = sphi 0, %s128
      %s130 = sphi 0, %s128
      %s131 = sphi 0, %s130
      %s145 = sphi 0, %s131
      %s149 = sphi 0, %s149
      %s151 = sphi 0, %s149
      %s152 = sphi 0, %s151
      %s166 = sphi 0, %s152
      %s170 = sphi 0, %s170
      %s172 = sphi 0, %s170
      %s173 = sphi 0, %s172
      %s187 = sphi 0, %s173
      %s191 = sphi 0, %s191
      %s193 = sphi 0, %s191
      %s194 = sphi 0, %s193
      %s208 = sphi 0, %s194
      %s212 = sphi 0, %s212
      %s214 = sphi 0, %s212
      %s215 = sphi 0, %s214
      %s229 = sphi 0, %s215
      %s233 = sphi 0, %s233
      %s235 = sphi 0, %s233
      %s236 = sphi 0, %s235
      %s250 = sphi 0, %s236
      %s254 = sphi 0, %s254
      %s256 = sphi 0, %s254
      %s257 = sphi 0, %s256
      %s271 = sphi 0, %s257
      %s277 = sphi 0, %s279
      %s280 = sphi 0, %s277
      %s281 = sphi 0, %s280
      %s297 = sphi 0, %s281
    $region4: #{tpu_custom_call.1} parent=1 // loop_header_branch
      %24 = sbr.rel (%p22) target = $region8
    $region5: #{tpu_custom_call.1} parent=1 // loop_body
      %s26 = ssub.s32 %s21, 1
      %s27 = ssub.s32 %s21, 2
      %s28 = sadd.s32 %s21, 1
      %s29 = ssub.s32 %s21, %s28
      %p30 = scmp.eq.s32.totalorder %s29, 0
      %s32 = sadd.s32 %s31, 1
      %s33 = scalar_select %p30, %s31, %s32
      %p36 = pneg %p30
      %p37 = scmp.eq.s32.totalorder %s21, 1
      %p38 = por %p36, %p37
      %p39 = scmp.ne.s32.totalorder %s31, %s34
      %p40 = scmp.eq.s32.totalorder %s21, 0
      %p41 = por %p39, %p40
      %p42 = scmp.ne.s32.totalorder %s31, %s34
      %p43 = scmp.eq.s32.totalorder %s26, 1
      %p44 = por %p42, %p43
      %p45 = scmp.ne.s32.totalorder %s34, %s35
      %p46 = scmp.eq.s32.totalorder %s26, 0
      %p47 = por %p45, %p46
      %p48 = scmp.ne.s32.totalorder %s34, %s35
      %p49 = scmp.eq.s32.totalorder %s27, 1
      %p50 = por %p48, %p49
      %p52 = scmp.ne.s32.totalorder %s35, %s51
      %p53 = scmp.eq.s32.totalorder %s27, 0
      %p54 = por %p52, %p53
      %s55 = ssub.s32 %s21, %s28
      %p56 = scmp.eq.s32.totalorder %s55, 0
      %s58 = sadd.s32 %s57, 1
      %s59 = scalar_select %p56, %s57, %s58
      %p62 = pneg %p56
      %p63 = scmp.eq.s32.totalorder %s21, 1
      %p64 = por %p62, %p63
      %p65 = scmp.ne.s32.totalorder %s57, %s60
      %p66 = scmp.eq.s32.totalorder %s21, 0
      %p67 = por %p65, %p66
      %p68 = scmp.ne.s32.totalorder %s57, %s60
      %p69 = scmp.eq.s32.totalorder %s26, 1
      %p70 = por %p68, %p69
      %p71 = scmp.ne.s32.totalorder %s60, %s61
      %p72 = scmp.eq.s32.totalorder %s26, 0
      %p73 = por %p71, %p72
      %p74 = scmp.ne.s32.totalorder %s60, %s61
      %p75 = scmp.eq.s32.totalorder %s27, 1
      %p76 = por %p74, %p75
      %p78 = scmp.ne.s32.totalorder %s61, %s77
      %p79 = scmp.eq.s32.totalorder %s27, 0
      %p80 = por %p78, %p79
      %s82 = sadd.s32 %s81, 1
      %p85 = scmp.eq.s32.totalorder %s21, 1
      %p86 = scmp.ne.s32.totalorder %s81, %s83
      %p87 = scmp.eq.s32.totalorder %s21, 0
      %p88 = por %p86, %p87
      %p89 = scmp.ne.s32.totalorder %s81, %s83
      %p90 = scmp.eq.s32.totalorder %s26, 1
      %p91 = por %p89, %p90
      %p92 = scmp.ne.s32.totalorder %s83, %s84
      %p93 = scmp.eq.s32.totalorder %s26, 0
      %p94 = por %p92, %p93
      %p95 = scmp.ne.s32.totalorder %s83, %s84
      %p96 = scmp.eq.s32.totalorder %s27, 1
      %p97 = por %p95, %p96
      %p99 = scmp.ne.s32.totalorder %s84, %s98
      %p100 = scmp.eq.s32.totalorder %s27, 0
      %p101 = por %p99, %p100
      %s102 = ssub.s32 %s21, %s28
      %p103 = scmp.eq.s32.totalorder %s102, 0
      %s105 = sadd.s32 %s104, 1
      %s106 = scalar_select %p103, %s104, %s105
      %p109 = pneg %p103
      %p110 = scmp.eq.s32.totalorder %s21, 1
      %p111 = por %p109, %p110
      %p112 = scmp.ne.s32.totalorder %s104, %s107
      %p113 = scmp.eq.s32.totalorder %s21, 0
      %p114 = por %p112, %p113
      %p115 = scmp.ne.s32.totalorder %s104, %s107
      %p116 = scmp.eq.s32.totalorder %s26, 1
      %p117 = por %p115, %p116
      %p118 = scmp.ne.s32.totalorder %s107, %s108
      %p119 = scmp.eq.s32.totalorder %s26, 0
      %p120 = por %p118, %p119
      %p121 = scmp.ne.s32.totalorder %s107, %s108
      %p122 = scmp.eq.s32.totalorder %s27, 1
      %p123 = por %p121, %p122
      %p125 = scmp.ne.s32.totalorder %s108, %s124
      %p126 = scmp.eq.s32.totalorder %s27, 0
      %p127 = por %p125, %p126
      %s129 = sadd.s32 %s128, 1
      %p132 = scmp.eq.s32.totalorder %s21, 1
      %p133 = scmp.ne.s32.totalorder %s128, %s130
      %p134 = scmp.eq.s32.totalorder %s21, 0
      %p135 = por %p133, %p134
      %p136 = scmp.ne.s32.totalorder %s128, %s130
      %p137 = scmp.eq.s32.totalorder %s26, 1
      %p138 = por %p136, %p137
      %p139 = scmp.ne.s32.totalorder %s130, %s131
      %p140 = scmp.eq.s32.totalorder %s26, 0
      %p141 = por %p139, %p140
      %p142 = scmp.ne.s32.totalorder %s130, %s131
      %p143 = scmp.eq.s32.totalorder %s27, 1
      %p144 = por %p142, %p143
      %p146 = scmp.ne.s32.totalorder %s131, %s145
      %p147 = scmp.eq.s32.totalorder %s27, 0
      %p148 = por %p146, %p147
      %s150 = sadd.s32 %s149, 1
      %p153 = scmp.eq.s32.totalorder %s21, 1
      %p154 = scmp.ne.s32.totalorder %s149, %s151
      %p155 = scmp.eq.s32.totalorder %s21, 0
      %p156 = por %p154, %p155
      %p157 = scmp.ne.s32.totalorder %s149, %s151
      %p158 = scmp.eq.s32.totalorder %s26, 1
      %p159 = por %p157, %p158
      %p160 = scmp.ne.s32.totalorder %s151, %s152
      %p161 = scmp.eq.s32.totalorder %s26, 0
      %p162 = por %p160, %p161
      %p163 = scmp.ne.s32.totalorder %s151, %s152
      %p164 = scmp.eq.s32.totalorder %s27, 1
      %p165 = por %p163, %p164
      %p167 = scmp.ne.s32.totalorder %s152, %s166
      %p168 = scmp.eq.s32.totalorder %s27, 0
      %p169 = por %p167, %p168
      %s171 = sadd.s32 %s170, 1
      %p174 = scmp.eq.s32.totalorder %s21, 1
      %p175 = scmp.ne.s32.totalorder %s170, %s172
      %p176 = scmp.eq.s32.totalorder %s21, 0
      %p177 = por %p175, %p176
      %p178 = scmp.ne.s32.totalorder %s170, %s172
      %p179 = scmp.eq.s32.totalorder %s26, 1
      %p180 = por %p178, %p179
      %p181 = scmp.ne.s32.totalorder %s172, %s173
      %p182 = scmp.eq.s32.totalorder %s26, 0
      %p183 = por %p181, %p182
      %p184 = scmp.ne.s32.totalorder %s172, %s173
      %p185 = scmp.eq.s32.totalorder %s27, 1
      %p186 = por %p184, %p185
      %p188 = scmp.ne.s32.totalorder %s173, %s187
      %p189 = scmp.eq.s32.totalorder %s27, 0
      %p190 = por %p188, %p189
      %s192 = sadd.s32 %s191, 1
      %p195 = scmp.eq.s32.totalorder %s21, 1
      %p196 = scmp.ne.s32.totalorder %s191, %s193
      %p197 = scmp.eq.s32.totalorder %s21, 0
      %p198 = por %p196, %p197
      %p199 = scmp.ne.s32.totalorder %s191, %s193
      %p200 = scmp.eq.s32.totalorder %s26, 1
      %p201 = por %p199, %p200
      %p202 = scmp.ne.s32.totalorder %s193, %s194
      %p203 = scmp.eq.s32.totalorder %s26, 0
      %p204 = por %p202, %p203
      %p205 = scmp.ne.s32.totalorder %s193, %s194
      %p206 = scmp.eq.s32.totalorder %s27, 1
      %p207 = por %p205, %p206
      %p209 = scmp.ne.s32.totalorder %s194, %s208
      %p210 = scmp.eq.s32.totalorder %s27, 0
      %p211 = por %p209, %p210
      %s213 = sadd.s32 %s212, 1
      %p216 = scmp.eq.s32.totalorder %s21, 1
      %p217 = scmp.ne.s32.totalorder %s212, %s214
      %p218 = scmp.eq.s32.totalorder %s21, 0
      %p219 = por %p217, %p218
      %p220 = scmp.ne.s32.totalorder %s212, %s214
      %p221 = scmp.eq.s32.totalorder %s26, 1
      %p222 = por %p220, %p221
      %p223 = scmp.ne.s32.totalorder %s214, %s215
      %p224 = scmp.eq.s32.totalorder %s26, 0
      %p225 = por %p223, %p224
      %p226 = scmp.ne.s32.totalorder %s214, %s215
      %p227 = scmp.eq.s32.totalorder %s27, 1
      %p228 = por %p226, %p227
      %p230 = scmp.ne.s32.totalorder %s215, %s229
      %p231 = scmp.eq.s32.totalorder %s27, 0
      %p232 = por %p230, %p231
      %s234 = sadd.s32 %s233, 1
      %p237 = scmp.eq.s32.totalorder %s21, 1
      %p238 = scmp.ne.s32.totalorder %s233, %s235
      %p239 = scmp.eq.s32.totalorder %s21, 0
      %p240 = por %p238, %p239
      %p241 = scmp.ne.s32.totalorder %s233, %s235
      %p242 = scmp.eq.s32.totalorder %s26, 1
      %p243 = por %p241, %p242
      %p244 = scmp.ne.s32.totalorder %s235, %s236
      %p245 = scmp.eq.s32.totalorder %s26, 0
      %p246 = por %p244, %p245
      %p247 = scmp.ne.s32.totalorder %s235, %s236
      %p248 = scmp.eq.s32.totalorder %s27, 1
      %p249 = por %p247, %p248
      %p251 = scmp.ne.s32.totalorder %s236, %s250
      %p252 = scmp.eq.s32.totalorder %s27, 0
      %p253 = por %p251, %p252
      %s255 = sadd.s32 %s254, 1
      %p258 = scmp.eq.s32.totalorder %s21, 1
      %p259 = scmp.ne.s32.totalorder %s254, %s256
      %p260 = scmp.eq.s32.totalorder %s21, 0
      %p261 = por %p259, %p260
      %p262 = scmp.ne.s32.totalorder %s254, %s256
      %p263 = scmp.eq.s32.totalorder %s26, 1
      %p264 = por %p262, %p263
      %p265 = scmp.ne.s32.totalorder %s256, %s257
      %p266 = scmp.eq.s32.totalorder %s26, 0
      %p267 = por %p265, %p266
      %p268 = scmp.ne.s32.totalorder %s256, %s257
      %p269 = scmp.eq.s32.totalorder %s27, 1
      %p270 = por %p268, %p269
      %p272 = scmp.ne.s32.totalorder %s257, %s271
      %p273 = scmp.eq.s32.totalorder %s27, 0
      %p274 = por %p272, %p273
      %s275 = ssub.s32 %s21, %s28
      %p276 = scmp.eq.s32.totalorder %s275, 0
      %s278 = sadd.s32 %s277, 1
      %s279 = scalar_select %p276, %s277, %s278
      %p282 = pneg %p276
      %p283 = scmp.eq.s32.totalorder %s21, 1
      %p284 = por %p282, %p283
      %p285 = scmp.ne.s32.totalorder %s277, %s280
      %p286 = scmp.eq.s32.totalorder %s21, 0
      %p287 = por %p285, %p286
      %p288 = scmp.ne.s32.totalorder %s277, %s280
      %p289 = scmp.eq.s32.totalorder %s26, 1
      %p290 = por %p288, %p289
      %p291 = scmp.ne.s32.totalorder %s280, %s281
      %p292 = scmp.eq.s32.totalorder %s26, 0
      %p293 = por %p291, %p292
      %p294 = scmp.ne.s32.totalorder %s280, %s281
      %p295 = scmp.eq.s32.totalorder %s27, 1
      %p296 = por %p294, %p295
      %p298 = scmp.ne.s32.totalorder %s281, %s297
      %p299 = scmp.eq.s32.totalorder %s27, 0
      %p300 = por %p298, %p299
      %p301 = scmp.le.s32.totalorder 1, %s21
      %p302 = scmp.lt.s32.totalorder %s21, 3
      %p303 = pnand %p301, %p302
      %p304 = pneg %p303
      // Predicated region
      $region9: #{tpu_custom_call.1} parent=5 // pred_check
        _
      $region10: #{tpu_custom_call.1} parent=5 // pred_check_branch
        %306 = sbr.rel (%p303) target = $region12
      $region11: #{tpu_custom_call.1} parent=5 // pred_region
        %s307 = ssub.s32 %s21, 1
        // Predicated region
        $region13: #{tpu_custom_call.1} parent=11 // pred_check
          %p308 = pneg %p94
        $region14: #{tpu_custom_call.1} parent=11 // pred_check_branch
          %310 = sbr.rel (%p308) target = $region16
        $region15: #{tpu_custom_call.1} parent=11 // pred_region
          _
        $region16: #{tpu_custom_call.1} parent=11 // pred_fallthru
          _
        // Predicated region
        $region17: #{tpu_custom_call.1} parent=11 // pred_check
          %p311 = pneg %p141
        $region18: #{tpu_custom_call.1} parent=11 // pred_check_branch
          %313 = sbr.rel (%p311) target = $region20
        $region19: #{tpu_custom_call.1} parent=11 // pred_region
          _
        $region20: #{tpu_custom_call.1} parent=11 // pred_fallthru
          _
        // Predicated region
        $region21: #{tpu_custom_call.1} parent=11 // pred_check
          %p314 = pneg %p162
        $region22: #{tpu_custom_call.1} parent=11 // pred_check_branch
          %316 = sbr.rel (%p314) target = $region24
        $region23: #{tpu_custom_call.1} parent=11 // pred_region
          %s318 = ssub.s32 512, 512
          %319 = vsyncadd [#allocation3], %s318
          %s320 = sshll.u32 [#allocation2], 4
          %s321 = int_to_ptr.vmem [resolvable:$true] %s320
          %326 = dma.hbm_to_vmem [thread:$0]  %s5, 512, %s321, [#allocation3], 128, 128, 8
        $region24: #{tpu_custom_call.1} parent=11 // pred_fallthru
          _
        // Predicated region
        $region25: #{tpu_custom_call.1} parent=11 // pred_check
          %p327 = pneg %p183
        $region26: #{tpu_custom_call.1} parent=11 // pred_check_branch
          %329 = sbr.rel (%p327) target = $region28
        $region27: #{tpu_custom_call.1} parent=11 // pred_region
          _
        $region28: #{tpu_custom_call.1} parent=11 // pred_fallthru
          _
        // Predicated region
        $region29: #{tpu_custom_call.1} parent=11 // pred_check
          %p330 = pneg %p204
        $region30: #{tpu_custom_call.1} parent=11 // pred_check_branch
          %332 = sbr.rel (%p330) target = $region32
        $region31: #{tpu_custom_call.1} parent=11 // pred_region
          _
        $region32: #{tpu_custom_call.1} parent=11 // pred_fallthru
          _
        // Predicated region
        $region33: #{tpu_custom_call.1} parent=11 // pred_check
          %p333 = pneg %p225
        $region34: #{tpu_custom_call.1} parent=11 // pred_check_branch
          %335 = sbr.rel (%p333) target = $region36
        $region35: #{tpu_custom_call.1} parent=11 // pred_region
          _
        $region36: #{tpu_custom_call.1} parent=11 // pred_fallthru
          _
        // Predicated region
        $region37: #{tpu_custom_call.1} parent=11 // pred_check
          %p336 = pneg %p246
        $region38: #{tpu_custom_call.1} parent=11 // pred_check_branch
          %338 = sbr.rel (%p336) target = $region40
        $region39: #{tpu_custom_call.1} parent=11 // pred_region
          _
        $region40: #{tpu_custom_call.1} parent=11 // pred_fallthru
          _
        // Predicated region
        $region41: #{tpu_custom_call.1} parent=11 // pred_check
          %p339 = pneg %p267
        $region42: #{tpu_custom_call.1} parent=11 // pred_check_branch
          %341 = sbr.rel (%p339) target = $region44
        $region43: #{tpu_custom_call.1} parent=11 // pred_region
          _
        $region44: #{tpu_custom_call.1} parent=11 // pred_fallthru
          _
      $region12: #{tpu_custom_call.1} parent=5 // pred_fallthru
        _
      %p342 = scmp.lt.s32.totalorder %s21, 2
      // Predicated region
      $region45: #{tpu_custom_call.1} parent=5 // pred_check
        %p343 = pneg %p342
      $region46: #{tpu_custom_call.1} parent=5 // pred_check_branch
        %345 = sbr.rel (%p343) target = $region48
      $region47: #{tpu_custom_call.1} parent=5 // pred_region
        // Predicated region
        $region49: #{tpu_custom_call.1} parent=47 // pred_check
          %p346 = pneg %p41
        $region50: #{tpu_custom_call.1} parent=47 // pred_check_branch
          %348 = sbr.rel (%p346) target = $region52
        $region51: #{tpu_custom_call.1} parent=47 // pred_region
          %s349 = smul.u32 4, %s21
          %p350 = scmp.lt.s32.totalorder %s349, 7
          %s351 = scalar_select %p350, %s349, 7
          %s352 = smul.addr %s351, 2
          %s353 = smul.addr %s352, 8
          %s354 = scalar_lea.vmem %s0, %s353
          %s355 = smul.u32 4, %s21
        $region52: #{tpu_custom_call.1} parent=47 // pred_fallthru
          _
        // Predicated region
        $region53: #{tpu_custom_call.1} parent=47 // pred_check
          %p356 = pneg %p67
        $region54: #{tpu_custom_call.1} parent=47 // pred_check_branch
          %358 = sbr.rel (%p356) target = $region56
        $region55: #{tpu_custom_call.1} parent=47 // pred_region
          %s359 = smul.u32 16, %s21
          %p360 = scmp.lt.s32.totalorder %s359, 31
          %s361 = scalar_select %p360, %s359, 31
          %s362 = smul.addr %s361, 8
          %s363 = scalar_lea.vmem %s1, %s362
          %s364 = smul.u32 16, %s21
        $region56: #{tpu_custom_call.1} parent=47 // pred_fallthru
          _
        // Predicated region
        $region57: #{tpu_custom_call.1} parent=47 // pred_check
          %p365 = pneg %p114
        $region58: #{tpu_custom_call.1} parent=47 // pred_check_branch
          %367 = sbr.rel (%p365) target = $region60
        $region59: #{tpu_custom_call.1} parent=47 // pred_region
          %s368 = smul.u32 16, %s21
          %p369 = scmp.lt.s32.totalorder %s368, 31
          %s370 = scalar_select %p369, %s368, 31
          %s371 = smul.addr %s370, 8
          %s372 = scalar_lea.vmem %s3, %s371
          %s373 = smul.u32 16, %s21
        $region60: #{tpu_custom_call.1} parent=47 // pred_fallthru
          _
      $region48: #{tpu_custom_call.1} parent=5 // pred_fallthru
        _
      %p374 = scmp.le.s32.totalorder 1, %s21
      %p375 = scmp.lt.s32.totalorder %s21, 3
      %p376 = pnand %p374, %p375
      %p377 = pneg %p376
      // Predicated region
      $region61: #{tpu_custom_call.1} parent=5 // pred_check
        _
      $region62: #{tpu_custom_call.1} parent=5 // pred_check_branch
        %379 = sbr.rel (%p376) target = $region64
      $region63: #{tpu_custom_call.1} parent=5 // pred_region
        %s380 = ssub.s32 %s21, 1
        // Predicated region
        $region65: #{tpu_custom_call.1} parent=63 // pred_check
          %p381 = pneg %p162
        $region66: #{tpu_custom_call.1} parent=63 // pred_check_branch
          %383 = sbr.rel (%p381) target = $region68
        $region67: #{tpu_custom_call.1} parent=63 // pred_region
          %384 = dma.done [#allocation3], 512
        $region68: #{tpu_custom_call.1} parent=63 // pred_fallthru
          _
        %s385 = smul.u32 4, %s26
        %p386 = scmp.lt.s32.totalorder %s385, 7
        %s387 = scalar_select %p386, %s385, 7
        %s388 = smul.addr %s387, 2
        %s389 = smul.addr %s388, 8
        %s390 = scalar_lea.vmem %s0, %s389
        %p391 = pneg %p47
        %p392 = pneg %p44
        %s393 = smul.u32 16, %s26
        %p394 = scmp.lt.s32.totalorder %s393, 31
        %s395 = scalar_select %p394, %s393, 31
        %s396 = smul.addr %s395, 8
        %s397 = scalar_lea.vmem %s1, %s396
        %p398 = pneg %p73
        %p399 = pneg %p70
        %p400 = pneg %p94
        %p401 = pneg %p91
        %s402 = smul.u32 16, %s26
        %p403 = scmp.lt.s32.totalorder %s402, 31
        %s404 = scalar_select %p403, %s402, 31
        %s405 = smul.addr %s404, 8
        %s406 = scalar_lea.vmem %s3, %s405
        %p407 = pneg %p120
        %p408 = pneg %p117
        %p409 = pneg %p141
        %p410 = pneg %p138
        %p411 = pneg %p162
        %p412 = pneg %p159
        %p413 = pneg %p183
        %p414 = pneg %p180
        %p415 = pneg %p204
        %p416 = pneg %p201
        %p417 = pneg %p225
        %p418 = pneg %p222
        %p419 = pneg %p246
        %p420 = pneg %p243
        %p421 = pneg %p267
        %p422 = pneg %p264
        %p423 = pneg %p293
        %p424 = pneg %p290
        %s425 = sand.u32 %s280, 1
        %s426 = scalar_lea.sflag [#allocation4], %s425
        %s427 = sand.u32 %s280, 1
        %s428 = smul.addr %s427, 128
        %s429 = scalar_lea.vmem [#allocation5], %s428
        %s430 = smul.u32 4, %s26
        %p431 = scmp.lt.s32.totalorder %s430, 7
        %s432 = scalar_select %p431, %s430, 7
        %s433 = smul.addr %s432, 2
        %s434 = smul.addr %s433, 8
        %s435 = scalar_lea.vmem %s0, %s434
        %s436 = smul.u32 4, %s26
        %s437 = smul.u32 16, %s26
        %p438 = scmp.lt.s32.totalorder %s437, 31
        %s439 = scalar_select %p438, %s437, 31
        %s440 = smul.addr %s439, 8
        %s441 = scalar_lea.vmem %s1, %s440
        %s442 = smul.u32 16, %s26
        %s443 = smul.u32 16, %s26
        %p444 = scmp.lt.s32.totalorder %s443, 31
        %s445 = scalar_select %p444, %s443, 31
        %s446 = smul.addr %s445, 8
        %s447 = scalar_lea.vmem %s3, %s446
        %s448 = smul.u32 16, %s26
        %s449 = smul.u32 16, %s26
        %v450 = vld [vmem:[%s435] sm:$0xff]
        %v451 = vld [vmem:[%s435 + $0x8] sm:$0xff]
        %v452 = vld [vmem:[%s435 + $0x10] sm:$0xff]
        %v453 = vld [vmem:[%s435 + $0x18] sm:$0xff]
        %v454 = vld [vmem:[%s435 + $0x20] sm:$0xff]
        %v455 = vld [vmem:[%s435 + $0x28] sm:$0xff]
        %v456 = vld [vmem:[%s435 + $0x30] sm:$0xff]
        %v457 = vld [vmem:[%s435 + $0x38] sm:$0xff]
        %v458 = vunpack.c.0.s8 %v450
        %v459 = vunpack.c.0.s8 %v451
        %v460 = vunpack.c.1.s8 %v450
        %v461 = vunpack.c.1.s8 %v451
        %v462 = vunpack.c.2.s8 %v450
        %v463 = vunpack.c.2.s8 %v451
        %v464 = vunpack.c.3.s8 %v450
        %v465 = vunpack.c.3.s8 %v451
        %v466 = vunpack.c.0.s8 %v452
        %v467 = vunpack.c.0.s8 %v453
        %v468 = vunpack.c.1.s8 %v452
        %v469 = vunpack.c.1.s8 %v453
        %v470 = vunpack.c.2.s8 %v452
        %v471 = vunpack.c.2.s8 %v453
        %v472 = vunpack.c.3.s8 %v452
        %v473 = vunpack.c.3.s8 %v453
        %v474 = vunpack.c.0.s8 %v454
        %v475 = vunpack.c.0.s8 %v455
        %v476 = vunpack.c.1.s8 %v454
        %v477 = vunpack.c.1.s8 %v455
        %v478 = vunpack.c.2.s8 %v454
        %v479 = vunpack.c.2.s8 %v455
        %v480 = vunpack.c.3.s8 %v454
        %v481 = vunpack.c.3.s8 %v455
        %v482 = vunpack.c.0.s8 %v456
        %v483 = vunpack.c.0.s8 %v457
        %v484 = vunpack.c.1.s8 %v456
        %v485 = vunpack.c.1.s8 %v457
        %v486 = vunpack.c.2.s8 %v456
        %v487 = vunpack.c.2.s8 %v457
        %v488 = vunpack.c.3.s8 %v456
        %v489 = vunpack.c.3.s8 %v457
        %v490 = vcvt.s32.f32 %v458
        %v491 = vcvt.s32.f32 %v459
        %v492 = vcvt.s32.f32 %v460
        %v493 = vcvt.s32.f32 %v461
        %v494 = vcvt.s32.f32 %v462
        %v495 = vcvt.s32.f32 %v463
        %v496 = vcvt.s32.f32 %v464
        %v497 = vcvt.s32.f32 %v465
        %v498 = vcvt.s32.f32 %v466
        %v499 = vcvt.s32.f32 %v467
        %v500 = vcvt.s32.f32 %v468
        %v501 = vcvt.s32.f32 %v469
        %v502 = vcvt.s32.f32 %v470
        %v503 = vcvt.s32.f32 %v471
        %v504 = vcvt.s32.f32 %v472
        %v505 = vcvt.s32.f32 %v473
        %v506 = vcvt.s32.f32 %v474
        %v507 = vcvt.s32.f32 %v475
        %v508 = vcvt.s32.f32 %v476
        %v509 = vcvt.s32.f32 %v477
        %v510 = vcvt.s32.f32 %v478
        %v511 = vcvt.s32.f32 %v479
        %v512 = vcvt.s32.f32 %v480
        %v513 = vcvt.s32.f32 %v481
        %v514 = vcvt.s32.f32 %v482
        %v515 = vcvt.s32.f32 %v483
        %v516 = vcvt.s32.f32 %v484
        %v517 = vcvt.s32.f32 %v485
        %v518 = vcvt.s32.f32 %v486
        %v519 = vcvt.s32.f32 %v487
        %v520 = vcvt.s32.f32 %v488
        %v521 = vcvt.s32.f32 %v489
        %v522 = vld [vmem:[%s2] sm:$0xff]
        %v523 = vld [vmem:[%s2 + $0x8] sm:$0xff]
        %v524 = vld [vmem:[%s2 + $0x10] sm:$0xff]
        %v525 = vld [vmem:[%s2 + $0x18] sm:$0xff]
        %v526 = vld [vmem:[%s2 + $0x20] sm:$0xff]
        %v527 = vld [vmem:[%s2 + $0x28] sm:$0xff]
        %v528 = vld [vmem:[%s2 + $0x30] sm:$0xff]
        %v529 = vld [vmem:[%s2 + $0x38] sm:$0xff]
        %v530 = vld [vmem:[%s2 + $0x40] sm:$0xff]
        %v531 = vld [vmem:[%s2 + $0x48] sm:$0xff]
        %v532 = vld [vmem:[%s2 + $0x50] sm:$0xff]
        %v533 = vld [vmem:[%s2 + $0x58] sm:$0xff]
        %v534 = vld [vmem:[%s2 + $0x60] sm:$0xff]
        %v535 = vld [vmem:[%s2 + $0x68] sm:$0xff]
        %v536 = vld [vmem:[%s2 + $0x70] sm:$0xff]
        %v537 = vld [vmem:[%s2 + $0x78] sm:$0xff]
        %v538 = vld [vmem:[%s2 + $0x80] sm:$0xff]
        %v539 = vld [vmem:[%s2 + $0x88] sm:$0xff]
        %v540 = vld [vmem:[%s2 + $0x90] sm:$0xff]
        %v541 = vld [vmem:[%s2 + $0x98] sm:$0xff]
        %v542 = vld [vmem:[%s2 + $0xa0] sm:$0xff]
        %v543 = vld [vmem:[%s2 + $0xa8] sm:$0xff]
        %v544 = vld [vmem:[%s2 + $0xb0] sm:$0xff]
        %v545 = vld [vmem:[%s2 + $0xb8] sm:$0xff]
        %v546 = vld [vmem:[%s2 + $0xc0] sm:$0xff]
        %v547 = vld [vmem:[%s2 + $0xc8] sm:$0xff]
        %v548 = vld [vmem:[%s2 + $0xd0] sm:$0xff]
        %v549 = vld [vmem:[%s2 + $0xd8] sm:$0xff]
        %v550 = vld [vmem:[%s2 + $0xe0] sm:$0xff]
        %v551 = vld [vmem:[%s2 + $0xe8] sm:$0xff]
        %v552 = vld [vmem:[%s2 + $0xf0] sm:$0xff]
        %v553 = vld [vmem:[%s2 + $0xf8] sm:$0xff]
        %554 = vmatprep.subr.mxu0 0.0
        %555 = vmatpush1.msra.mxu0 %v522
        %556 = vmatprep.subr.mxu0 0.0
        %557 = vmatpush1.msra.mxu0 %v523
        %558 = vmatprep.subr.mxu0 0.0
        %559 = vmatpush1.msra.mxu0 %v524
        %560 = vmatprep.subr.mxu0 0.0
        %561 = vmatpush1.msra.mxu0 %v525
        %562 = vmatprep.subr.mxu0 0.0
        %563 = vmatpush1.msra.mxu0 %v526
        %564 = vmatprep.subr.mxu0 0.0
        %565 = vmatpush1.msra.mxu0 %v527
        %566 = vmatprep.subr.mxu0 0.0
        %567 = vmatpush1.msra.mxu0 %v528
        %568 = vmatprep.subr.mxu0 0.0
        %569 = vmatpush1.msra.mxu0 %v529
        %570 = vmatprep.subr.mxu0 0.0
        %571 = vmatpush1.msra.mxu0 %v530
        %572 = vmatprep.subr.mxu0 0.0
        %573 = vmatpush1.msra.mxu0 %v531
        %574 = vmatprep.subr.mxu0 0.0
        %575 = vmatpush1.msra.mxu0 %v532
        %576 = vmatprep.subr.mxu0 0.0
        %577 = vmatpush1.msra.mxu0 %v533
        %578 = vmatprep.subr.mxu0 0.0
        %579 = vmatpush1.msra.mxu0 %v534
        %580 = vmatprep.subr.mxu0 0.0
        %581 = vmatpush1.msra.mxu0 %v535
        %582 = vmatprep.subr.mxu0 0.0
        %583 = vmatpush1.msra.mxu0 %v536
        %584 = vmatprep.subr.mxu0 0.0
        %585 = vmatpush1.msra.mxu0 %v537
        %586 = vmatprep.subr.mxu0 0.0
        %587 = vmatpush1.msra.mxu0 %v538
        %588 = vmatprep.subr.mxu0 0.0
        %589 = vmatpush1.msra.mxu0 %v539
        %590 = vmatprep.subr.mxu0 0.0
        %591 = vmatpush1.msra.mxu0 %v540
        %592 = vmatprep.subr.mxu0 0.0
        %593 = vmatpush1.msra.mxu0 %v541
        %594 = vmatprep.subr.mxu0 0.0
        %595 = vmatpush1.msra.mxu0 %v542
        %596 = vmatprep.subr.mxu0 0.0
        %597 = vmatpush1.msra.mxu0 %v543
        %598 = vmatprep.subr.mxu0 0.0
        %599 = vmatpush1.msra.mxu0 %v544
        %600 = vmatprep.subr.mxu0 0.0
        %601 = vmatpush1.msra.mxu0 %v545
        %602 = vmatprep.subr.mxu0 0.0
        %603 = vmatpush1.msra.mxu0 %v546
        %604 = vmatprep.subr.mxu0 0.0
        %605 = vmatpush1.msra.mxu0 %v547
        %606 = vmatprep.subr.mxu0 0.0
        %607 = vmatpush1.msra.mxu0 %v548
        %608 = vmatprep.subr.mxu0 0.0
        %609 = vmatpush1.msra.mxu0 %v549
        %610 = vmatprep.subr.mxu0 0.0
        %611 = vmatpush1.msra.mxu0 %v550
        %612 = vmatprep.subr.mxu0 0.0
        %613 = vmatpush1.msra.mxu0 %v551
        %614 = vmatprep.subr.mxu0 0.0
        %615 = vmatpush1.msra.mxu0 %v552
        %616 = vmatprep.subr.mxu0 0.0
        %617 = vmatpush1.msra.mxu0 %v553
        %618 = vmatprep.mubr.f32.mxu0 %v491
        %619 = vmatmul.mubr.f32.gmra.mrb[0].mxu0 %v490
        %v620 = vpop.f32.mrb[0].mxu0
        %v621 = vadd.f32 0.0, %v620
        %v622 = vpop.f32.mrb[0].mxu0
        %623 = vmatprep.mubr.f32.mxu0 %v493
        %624 = vmatmul.mubr.f32.gmra.mrb[0].mxu0 %v492
        %v625 = vpop.f32.mrb[0].mxu0
        %v626 = vadd.f32 0.0, %v625
        %v627 = vpop.f32.mrb[0].mxu0
        %628 = vmatprep.mubr.f32.mxu0 %v495
        %629 = vmatmul.mubr.f32.gmra.mrb[0].mxu0 %v494
        %v630 = vpop.f32.mrb[0].mxu0
        %v631 = vadd.f32 0.0, %v630
        %v632 = vpop.f32.mrb[0].mxu0
        %633 = vmatprep.mubr.f32.mxu0 %v497
        %634 = vmatmul.mubr.f32.gmra.mrb[0].mxu0 %v496
        %v635 = vpop.f32.mrb[0].mxu0
        %v636 = vadd.f32 0.0, %v635
        %v637 = vpop.f32.mrb[0].mxu0
        %638 = vmatprep.mubr.f32.mxu0 %v499
        %639 = vmatmul.mubr.f32.gmra.mrb[0].mxu0 %v498
        %v640 = vpop.f32.mrb[0].mxu0
        %v641 = vadd.f32 0.0, %v640
        %v642 = vpop.f32.mrb[0].mxu0
        %643 = vmatprep.mubr.f32.mxu0 %v501
        %644 = vmatmul.mubr.f32.gmra.mrb[0].mxu0 %v500
        %v645 = vpop.f32.mrb[0].mxu0
        %v646 = vadd.f32 0.0, %v645
        %v647 = vpop.f32.mrb[0].mxu0
        %648 = vmatprep.mubr.f32.mxu0 %v503
        %649 = vmatmul.mubr.f32.gmra.mrb[0].mxu0 %v502
        %v650 = vpop.f32.mrb[0].mxu0
        %v651 = vadd.f32 0.0, %v650
        %v652 = vpop.f32.mrb[0].mxu0
        %653 = vmatprep.mubr.f32.mxu0 %v505
        %654 = vmatmul.mubr.f32.gmra.mrb[0].mxu0 %v504
        %v655 = vpop.f32.mrb[0].mxu0
        %v656 = vadd.f32 0.0, %v655
        %v657 = vpop.f32.mrb[0].mxu0
        %658 = vmatprep.mubr.f32.mxu0 %v507
        %659 = vmatmul.mubr.f32.gmra.mrb[0].mxu0 %v506
        %v660 = vpop.f32.mrb[0].mxu0
        %v661 = vadd.f32 0.0, %v660
        %v662 = vpop.f32.mrb[0].mxu0
        %663 = vmatprep.mubr.f32.mxu0 %v509
        %664 = vmatmul.mubr.f32.gmra.mrb[0].mxu0 %v508
        %v665 = vpop.f32.mrb[0].mxu0
        %v666 = vadd.f32 0.0, %v665
        %v667 = vpop.f32.mrb[0].mxu0
        %668 = vmatprep.mubr.f32.mxu0 %v511
        %669 = vmatmul.mubr.f32.gmra.mrb[0].mxu0 %v510
        %v670 = vpop.f32.mrb[0].mxu0
        %v671 = vadd.f32 0.0, %v670
        %v672 = vpop.f32.mrb[0].mxu0
        %673 = vmatprep.mubr.f32.mxu0 %v513
        %674 = vmatmul.mubr.f32.gmra.mrb[0].mxu0 %v512
        %v675 = vpop.f32.mrb[0].mxu0
        %v676 = vadd.f32 0.0, %v675
        %v677 = vpop.f32.mrb[0].mxu0
        %678 = vmatprep.mubr.f32.mxu0 %v515
        %679 = vmatmul.mubr.f32.gmra.mrb[0].mxu0 %v514
        %v680 = vpop.f32.mrb[0].mxu0
        %v681 = vadd.f32 0.0, %v680
        %v682 = vpop.f32.mrb[0].mxu0
        %683 = vmatprep.mubr.f32.mxu0 %v517
        %684 = vmatmul.mubr.f32.gmra.mrb[0].mxu0 %v516
        %v685 = vpop.f32.mrb[0].mxu0
        %v686 = vadd.f32 0.0, %v685
        %v687 = vpop.f32.mrb[0].mxu0
        %688 = vmatprep.mubr.f32.mxu0 %v519
        %689 = vmatmul.mubr.f32.gmra.mrb[0].mxu0 %v518
        %v690 = vpop.f32.mrb[0].mxu0
        %v691 = vadd.f32 0.0, %v690
        %v692 = vpop.f32.mrb[0].mxu0
        %693 = vmatprep.mubr.f32.mxu0 %v521
        %694 = vmatmul.mubr.f32.gmra.mrb[0].mxu0 %v520
        %v695 = vpop.f32.mrb[0].mxu0
        %v696 = vadd.f32 0.0, %v695
        %v697 = vpop.f32.mrb[0].mxu0
        %698 = vdwg.mxu0
        %v699 = vld [vmem:[%s441] sm:$0xff]
        %v700 = vld [vmem:[%s441 + $0x8] sm:$0xff]
        %v701 = vld [vmem:[%s441 + $0x10] sm:$0xff]
        %v702 = vld [vmem:[%s441 + $0x18] sm:$0xff]
        %v703 = vld [vmem:[%s441 + $0x20] sm:$0xff]
        %v704 = vld [vmem:[%s441 + $0x28] sm:$0xff]
        %v705 = vld [vmem:[%s441 + $0x30] sm:$0xff]
        %v706 = vld [vmem:[%s441 + $0x38] sm:$0xff]
        %v707 = vld [vmem:[%s441 + $0x40] sm:$0xff]
        %v708 = vld [vmem:[%s441 + $0x48] sm:$0xff]
        %v709 = vld [vmem:[%s441 + $0x50] sm:$0xff]
        %v710 = vld [vmem:[%s441 + $0x58] sm:$0xff]
        %v711 = vld [vmem:[%s441 + $0x60] sm:$0xff]
        %v712 = vld [vmem:[%s441 + $0x68] sm:$0xff]
        %v713 = vld [vmem:[%s441 + $0x70] sm:$0xff]
        %v714 = vld [vmem:[%s441 + $0x78] sm:$0xff]
        %716 = vset.pattern.permute.xlu0 0
        %717 = vperm.xlu0 %716, %v699
        %v718 = vpop.permute.xlu0 %717
        %721 = vset.pattern.permute.xlu0 0
        %722 = vperm.xlu0 %721, %v700
        %v723 = vpop.permute.xlu0 %722
        %726 = vset.pattern.permute.xlu0 0
        %727 = vperm.xlu0 %726, %v701
        %v728 = vpop.permute.xlu0 %727
        %731 = vset.pattern.permute.xlu0 0
        %732 = vperm.xlu0 %731, %v702
        %v733 = vpop.permute.xlu0 %732
        %736 = vset.pattern.permute.xlu0 0
        %737 = vperm.xlu0 %736, %v703
        %v738 = vpop.permute.xlu0 %737
        %741 = vset.pattern.permute.xlu0 0
        %742 = vperm.xlu0 %741, %v704
        %v743 = vpop.permute.xlu0 %742
        %746 = vset.pattern.permute.xlu0 0
        %747 = vperm.xlu0 %746, %v705
        %v748 = vpop.permute.xlu0 %747
        %751 = vset.pattern.permute.xlu0 0
        %752 = vperm.xlu0 %751, %v706
        %v753 = vpop.permute.xlu0 %752
        %756 = vset.pattern.permute.xlu0 0
        %757 = vperm.xlu0 %756, %v707
        %v758 = vpop.permute.xlu0 %757
        %761 = vset.pattern.permute.xlu0 0
        %762 = vperm.xlu0 %761, %v708
        %v763 = vpop.permute.xlu0 %762
        %766 = vset.pattern.permute.xlu0 0
        %767 = vperm.xlu0 %766, %v709
        %v768 = vpop.permute.xlu0 %767
        %771 = vset.pattern.permute.xlu0 0
        %772 = vperm.xlu0 %771, %v710
        %v773 = vpop.permute.xlu0 %772
        %776 = vset.pattern.permute.xlu0 0
        %777 = vperm.xlu0 %776, %v711
        %v778 = vpop.permute.xlu0 %777
        %781 = vset.pattern.permute.xlu0 0
        %782 = vperm.xlu0 %781, %v712
        %v783 = vpop.permute.xlu0 %782
        %786 = vset.pattern.permute.xlu0 0
        %787 = vperm.xlu0 %786, %v713
        %v788 = vpop.permute.xlu0 %787
        %791 = vset.pattern.permute.xlu0 0
        %792 = vperm.xlu0 %791, %v714
        %v793 = vpop.permute.xlu0 %792
        %v795 = vmul.f32 %v718, %v621
        %v796 = vmul.f32 %v723, %v626
        %v797 = vmul.f32 %v728, %v631
        %v798 = vmul.f32 %v733, %v636
        %v799 = vmul.f32 %v738, %v641
        %v800 = vmul.f32 %v743, %v646
        %v801 = vmul.f32 %v748, %v651
        %v802 = vmul.f32 %v753, %v656
        %v803 = vmul.f32 %v758, %v661
        %v804 = vmul.f32 %v763, %v666
        %v805 = vmul.f32 %v768, %v671
        %v806 = vmul.f32 %v773, %v676
        %v807 = vmul.f32 %v778, %v681
        %v808 = vmul.f32 %v783, %v686
        %v809 = vmul.f32 %v788, %v691
        %v810 = vmul.f32 %v793, %v696
        %v811 = vld [vmem:[%s4] sm:$0x1]
        %v813 = vlaneseq
        %v814 = vshrl.u32 %v813, 7
        %v815 = vsub.s32 0, %v814
        %v816 = vrot.slane %v811, %v815
        %v818 = vadd.f32 %v795, %v816
        %v819 = vadd.f32 %v796, %v816
        %v820 = vadd.f32 %v797, %v816
        %v821 = vadd.f32 %v798, %v816
        %v822 = vadd.f32 %v799, %v816
        %v823 = vadd.f32 %v800, %v816
        %v824 = vadd.f32 %v801, %v816
        %v825 = vadd.f32 %v802, %v816
        %v826 = vadd.f32 %v803, %v816
        %v827 = vadd.f32 %v804, %v816
        %v828 = vadd.f32 %v805, %v816
        %v829 = vadd.f32 %v806, %v816
        %v830 = vadd.f32 %v807, %v816
        %v831 = vadd.f32 %v808, %v816
        %v832 = vadd.f32 %v809, %v816
        %v833 = vadd.f32 %v810, %v816
        %v834 = vxor.u32 %v818, 2147483648
        %v835 = vxor.u32 %v819, 2147483648
        %v836 = vxor.u32 %v820, 2147483648
        %v837 = vxor.u32 %v821, 2147483648
        %v838 = vxor.u32 %v822, 2147483648
        %v839 = vxor.u32 %v823, 2147483648
        %v840 = vxor.u32 %v824, 2147483648
        %v841 = vxor.u32 %v825, 2147483648
        %v842 = vxor.u32 %v826, 2147483648
        %v843 = vxor.u32 %v827, 2147483648
        %v844 = vxor.u32 %v828, 2147483648
        %v845 = vxor.u32 %v829, 2147483648
        %v846 = vxor.u32 %v830, 2147483648
        %v847 = vxor.u32 %v831, 2147483648
        %v848 = vxor.u32 %v832, 2147483648
        %v849 = vxor.u32 %v833, 2147483648
        %v850 = vmul.f32 %v834, 1.442695
        %v851 = vpow.pop %v850
        %v852 = vmul.f32 %v835, 1.442695
        %v853 = vpow.pop %v852
        %v854 = vmul.f32 %v836, 1.442695
        %v855 = vpow.pop %v854
        %v856 = vmul.f32 %v837, 1.442695
        %v857 = vpow.pop %v856
        %v858 = vmul.f32 %v838, 1.442695
        %v859 = vpow.pop %v858
        %v860 = vmul.f32 %v839, 1.442695
        %v861 = vpow.pop %v860
        %v862 = vmul.f32 %v840, 1.442695
        %v863 = vpow.pop %v862
        %v864 = vmul.f32 %v841, 1.442695
        %v865 = vpow.pop %v864
        %v866 = vmul.f32 %v842, 1.442695
        %v867 = vpow.pop %v866
        %v868 = vmul.f32 %v843, 1.442695
        %v869 = vpow.pop %v868
        %v870 = vmul.f32 %v844, 1.442695
        %v871 = vpow.pop %v870
        %v872 = vmul.f32 %v845, 1.442695
        %v873 = vpow.pop %v872
        %v874 = vmul.f32 %v846, 1.442695
        %v875 = vpow.pop %v874
        %v876 = vmul.f32 %v847, 1.442695
        %v877 = vpow.pop %v876
        %v878 = vmul.f32 %v848, 1.442695
        %v879 = vpow.pop %v878
        %v880 = vmul.f32 %v849, 1.442695
        %v881 = vpow.pop %v880
        %v882 = vadd.f32 %v851, 1.0
        %v883 = vadd.f32 %v853, 1.0
        %v884 = vadd.f32 %v855, 1.0
        %v885 = vadd.f32 %v857, 1.0
        %v886 = vadd.f32 %v859, 1.0
        %v887 = vadd.f32 %v861, 1.0
        %v888 = vadd.f32 %v863, 1.0
        %v889 = vadd.f32 %v865, 1.0
        %v890 = vadd.f32 %v867, 1.0
        %v891 = vadd.f32 %v869, 1.0
        %v892 = vadd.f32 %v871, 1.0
        %v893 = vadd.f32 %v873, 1.0
        %v894 = vadd.f32 %v875, 1.0
        %v895 = vadd.f32 %v877, 1.0
        %v896 = vadd.f32 %v879, 1.0
        %v897 = vadd.f32 %v881, 1.0
        %v898 = vrcp.pop %v882
        %v899 = vmul.f32 1.0, %v898
        %v900 = vrcp.pop %v883
        %v901 = vmul.f32 1.0, %v900
        %v902 = vrcp.pop %v884
        %v903 = vmul.f32 1.0, %v902
        %v904 = vrcp.pop %v885
        %v905 = vmul.f32 1.0, %v904
        %v906 = vrcp.pop %v886
        %v907 = vmul.f32 1.0, %v906
        %v908 = vrcp.pop %v887
        %v909 = vmul.f32 1.0, %v908
        %v910 = vrcp.pop %v888
        %v911 = vmul.f32 1.0, %v910
        %v912 = vrcp.pop %v889
        %v913 = vmul.f32 1.0, %v912
        %v914 = vrcp.pop %v890
        %v915 = vmul.f32 1.0, %v914
        %v916 = vrcp.pop %v891
        %v917 = vmul.f32 1.0, %v916
        %v918 = vrcp.pop %v892
        %v919 = vmul.f32 1.0, %v918
        %v920 = vrcp.pop %v893
        %v921 = vmul.f32 1.0, %v920
        %v922 = vrcp.pop %v894
        %v923 = vmul.f32 1.0, %v922
        %v924 = vrcp.pop %v895
        %v925 = vmul.f32 1.0, %v924
        %v926 = vrcp.pop %v896
        %v927 = vmul.f32 1.0, %v926
        %v928 = vrcp.pop %v897
        %v929 = vmul.f32 1.0, %v928
        %v930 = vmul.f32 %v818, %v899
        %v931 = vmul.f32 %v819, %v901
        %v932 = vmul.f32 %v820, %v903
        %v933 = vmul.f32 %v821, %v905
        %v934 = vmul.f32 %v822, %v907
        %v935 = vmul.f32 %v823, %v909
        %v936 = vmul.f32 %v824, %v911
        %v937 = vmul.f32 %v825, %v913
        %v938 = vmul.f32 %v826, %v915
        %v939 = vmul.f32 %v827, %v917
        %v940 = vmul.f32 %v828, %v919
        %v941 = vmul.f32 %v829, %v921
        %v942 = vmul.f32 %v830, %v923
        %v943 = vmul.f32 %v831, %v925
        %v944 = vmul.f32 %v832, %v927
        %v945 = vmul.f32 %v833, %v929
        %v946 = vld [vmem:[%s447] sm:$0xff]
        %v947 = vld [vmem:[%s447 + $0x8] sm:$0xff]
        %v948 = vld [vmem:[%s447 + $0x10] sm:$0xff]
        %v949 = vld [vmem:[%s447 + $0x18] sm:$0xff]
        %v950 = vld [vmem:[%s447 + $0x20] sm:$0xff]
        %v951 = vld [vmem:[%s447 + $0x28] sm:$0xff]
        %v952 = vld [vmem:[%s447 + $0x30] sm:$0xff]
        %v953 = vld [vmem:[%s447 + $0x38] sm:$0xff]
        %v954 = vld [vmem:[%s447 + $0x40] sm:$0xff]
        %v955 = vld [vmem:[%s447 + $0x48] sm:$0xff]
        %v956 = vld [vmem:[%s447 + $0x50] sm:$0xff]
        %v957 = vld [vmem:[%s447 + $0x58] sm:$0xff]
        %v958 = vld [vmem:[%s447 + $0x60] sm:$0xff]
        %v959 = vld [vmem:[%s447 + $0x68] sm:$0xff]
        %v960 = vld [vmem:[%s447 + $0x70] sm:$0xff]
        %v961 = vld [vmem:[%s447 + $0x78] sm:$0xff]
        %v962 = vld [vmem:[#allocation2] sm:$0xff]
        %v963 = vld [vmem:[#allocation2 + $0x8] sm:$0xff]
        %v964 = vld [vmem:[#allocation2 + $0x10] sm:$0xff]
        %v965 = vld [vmem:[#allocation2 + $0x18] sm:$0xff]
        %v966 = vld [vmem:[%s6] sm:$0x1]
        %v968 = vlaneseq
        %v969 = vshrl.u32 %v968, 7
        %v970 = vsub.s32 0, %v969
        %v971 = vrot.slane %v966, %v970
        %vm973 = vcmask 261120
        %v975 = vsel %vm973, %v946, 0
        %v978 = vsel %vm973, %v947, 0
        %v981 = vsel %vm973, %v948, 0
        %v984 = vsel %vm973, %v949, 0
        %v987 = vsel %vm973, %v950, 0
        %v990 = vsel %vm973, %v951, 0
        %v993 = vsel %vm973, %v952, 0
        %v996 = vsel %vm973, %v953, 0
        %v999 = vsel %vm973, %v954, 0
        %v1002 = vsel %vm973, %v955, 0
        %v1005 = vsel %vm973, %v956, 0
        %v1008 = vsel %vm973, %v957, 0
        %v1011 = vsel %vm973, %v958, 0
        %v1014 = vsel %vm973, %v959, 0
        %v1017 = vsel %vm973, %v960, 0
        %v1020 = vsel %vm973, %v961, 0
        %1022 = vmatprep.subr.mxu0 0.0
        %1023 = vmatpush1.msra.mxu0 %v962
        %1024 = vmatprep.subr.mxu0 0.0
        %1025 = vmatpush1.msra.mxu0 %v963
        %1026 = vmatprep.subr.mxu0 0.0
        %1027 = vmatpush1.msra.mxu0 %v964
        %1028 = vmatprep.subr.mxu0 0.0
        %1029 = vmatpush1.msra.mxu0 %v965
        %1030 = vmatprep.subr.mxu0 0.0
        %1031 = vmatpush1.msra.mxu0 0.0
        %1032 = vmatprep.subr.mxu0 0.0
        %1033 = vmatpush1.msra.mxu0 0.0
        %1034 = vmatprep.subr.mxu0 0.0
        %1035 = vmatpush1.msra.mxu0 0.0
        %1036 = vmatprep.subr.mxu0 0.0
        %1037 = vmatpush1.msra.mxu0 0.0
        %1038 = vmatprep.subr.mxu0 0.0
        %1039 = vmatpush1.msra.mxu0 0.0
        %1040 = vmatprep.subr.mxu0 0.0
        %1041 = vmatpush1.msra.mxu0 0.0
        %1042 = vmatprep.subr.mxu0 0.0
        %1043 = vmatpush1.msra.mxu0 0.0
        %1044 = vmatprep.subr.mxu0 0.0
        %1045 = vmatpush1.msra.mxu0 0.0
        %1046 = vmatprep.subr.mxu0 0.0
        %1047 = vmatpush1.msra.mxu0 0.0
        %1048 = vmatprep.subr.mxu0 0.0
        %1049 = vmatpush1.msra.mxu0 0.0
        %1050 = vmatprep.subr.mxu0 0.0
        %1051 = vmatpush1.msra.mxu0 0.0
        %1052 = vmatprep.subr.mxu0 0.0
        %1053 = vmatpush1.msra.mxu0 0.0
        %1054 = vmatprep.subr.mxu0 0.0
        %1055 = vmatpush1.msra.mxu0 0.0
        %1056 = vmatprep.subr.mxu0 0.0
        %1057 = vmatpush1.msra.mxu0 0.0
        %1058 = vmatprep.subr.mxu0 0.0
        %1059 = vmatpush1.msra.mxu0 0.0
        %1060 = vmatprep.subr.mxu0 0.0
        %1061 = vmatpush1.msra.mxu0 0.0
        %1062 = vmatprep.subr.mxu0 0.0
        %1063 = vmatpush1.msra.mxu0 0.0
        %1064 = vmatprep.subr.mxu0 0.0
        %1065 = vmatpush1.msra.mxu0 0.0
        %1066 = vmatprep.subr.mxu0 0.0
        %1067 = vmatpush1.msra.mxu0 0.0
        %1068 = vmatprep.subr.mxu0 0.0
        %1069 = vmatpush1.msra.mxu0 0.0
        %1070 = vmatprep.subr.mxu0 0.0
        %1071 = vmatpush1.msra.mxu0 0.0
        %1072 = vmatprep.subr.mxu0 0.0
        %1073 = vmatpush1.msra.mxu0 0.0
        %1074 = vmatprep.subr.mxu0 0.0
        %1075 = vmatpush1.msra.mxu0 0.0
        %1076 = vmatprep.subr.mxu0 0.0
        %1077 = vmatpush1.msra.mxu0 0.0
        %1078 = vmatprep.subr.mxu0 0.0
        %1079 = vmatpush1.msra.mxu0 0.0
        %1080 = vmatprep.subr.mxu0 0.0
        %1081 = vmatpush1.msra.mxu0 0.0
        %1082 = vmatprep.subr.mxu0 0.0
        %1083 = vmatpush1.msra.mxu0 0.0
        %1084 = vmatprep.subr.mxu0 0.0
        %1085 = vmatpush1.msra.mxu0 0.0
        %1086 = vmatprep.mubr.f32.mxu0 0.0
        %1087 = vmatmul.mubr.f32.gmra.mrb[0].mxu0 %v975
        %v1088 = vpop.f32.mrb[0].mxu0
        %v1089 = vadd.f32 %v971, %v1088
        %v1090 = vpop.f32.mrb[0].mxu0
        %1091 = vmatprep.mubr.f32.mxu0 0.0
        %1092 = vmatmul.mubr.f32.gmra.mrb[0].mxu0 %v978
        %v1093 = vpop.f32.mrb[0].mxu0
        %v1094 = vadd.f32 %v971, %v1093
        %v1095 = vpop.f32.mrb[0].mxu0
        %1096 = vmatprep.mubr.f32.mxu0 0.0
        %1097 = vmatmul.mubr.f32.gmra.mrb[0].mxu0 %v981
        %v1098 = vpop.f32.mrb[0].mxu0
        %v1099 = vadd.f32 %v971, %v1098
        %v1100 = vpop.f32.mrb[0].mxu0
        %1101 = vmatprep.mubr.f32.mxu0 0.0
        %1102 = vmatmul.mubr.f32.gmra.mrb[0].mxu0 %v984
        %v1103 = vpop.f32.mrb[0].mxu0
        %v1104 = vadd.f32 %v971, %v1103
        %v1105 = vpop.f32.mrb[0].mxu0
        %1106 = vmatprep.mubr.f32.mxu0 0.0
        %1107 = vmatmul.mubr.f32.gmra.mrb[0].mxu0 %v987
        %v1108 = vpop.f32.mrb[0].mxu0
        %v1109 = vadd.f32 %v971, %v1108
        %v1110 = vpop.f32.mrb[0].mxu0
        %1111 = vmatprep.mubr.f32.mxu0 0.0
        %1112 = vmatmul.mubr.f32.gmra.mrb[0].mxu0 %v990
        %v1113 = vpop.f32.mrb[0].mxu0
        %v1114 = vadd.f32 %v971, %v1113
        %v1115 = vpop.f32.mrb[0].mxu0
        %1116 = vmatprep.mubr.f32.mxu0 0.0
        %1117 = vmatmul.mubr.f32.gmra.mrb[0].mxu0 %v993
        %v1118 = vpop.f32.mrb[0].mxu0
        %v1119 = vadd.f32 %v971, %v1118
        %v1120 = vpop.f32.mrb[0].mxu0
        %1121 = vmatprep.mubr.f32.mxu0 0.0
        %1122 = vmatmul.mubr.f32.gmra.mrb[0].mxu0 %v996
        %v1123 = vpop.f32.mrb[0].mxu0
        %v1124 = vadd.f32 %v971, %v1123
        %v1125 = vpop.f32.mrb[0].mxu0
        %1126 = vmatprep.mubr.f32.mxu0 0.0
        %1127 = vmatmul.mubr.f32.gmra.mrb[0].mxu0 %v999
        %v1128 = vpop.f32.mrb[0].mxu0
        %v1129 = vadd.f32 %v971, %v1128
        %v1130 = vpop.f32.mrb[0].mxu0
        %1131 = vmatprep.mubr.f32.mxu0 0.0
        %1132 = vmatmul.mubr.f32.gmra.mrb[0].mxu0 %v1002
        %v1133 = vpop.f32.mrb[0].mxu0
        %v1134 = vadd.f32 %v971, %v1133
        %v1135 = vpop.f32.mrb[0].mxu0
        %1136 = vmatprep.mubr.f32.mxu0 0.0
        %1137 = vmatmul.mubr.f32.gmra.mrb[0].mxu0 %v1005
        %v1138 = vpop.f32.mrb[0].mxu0
        %v1139 = vadd.f32 %v971, %v1138
        %v1140 = vpop.f32.mrb[0].mxu0
        %1141 = vmatprep.mubr.f32.mxu0 0.0
        %1142 = vmatmul.mubr.f32.gmra.mrb[0].mxu0 %v1008
        %v1143 = vpop.f32.mrb[0].mxu0
        %v1144 = vadd.f32 %v971, %v1143
        %v1145 = vpop.f32.mrb[0].mxu0
        %1146 = vmatprep.mubr.f32.mxu0 0.0
        %1147 = vmatmul.mubr.f32.gmra.mrb[0].mxu0 %v1011
        %v1148 = vpop.f32.mrb[0].mxu0
        %v1149 = vadd.f32 %v971, %v1148
        %v1150 = vpop.f32.mrb[0].mxu0
        %1151 = vmatprep.mubr.f32.mxu0 0.0
        %1152 = vmatmul.mubr.f32.gmra.mrb[0].mxu0 %v1014
        %v1153 = vpop.f32.mrb[0].mxu0
        %v1154 = vadd.f32 %v971, %v1153
        %v1155 = vpop.f32.mrb[0].mxu0
        %1156 = vmatprep.mubr.f32.mxu0 0.0
        %1157 = vmatmul.mubr.f32.gmra.mrb[0].mxu0 %v1017
        %v1158 = vpop.f32.mrb[0].mxu0
        %v1159 = vadd.f32 %v971, %v1158
        %v1160 = vpop.f32.mrb[0].mxu0
        %1161 = vmatprep.mubr.f32.mxu0 0.0
        %1162 = vmatmul.mubr.f32.gmra.mrb[0].mxu0 %v1020
        %v1163 = vpop.f32.mrb[0].mxu0
        %v1164 = vadd.f32 %v971, %v1163
        %v1165 = vpop.f32.mrb[0].mxu0
        %1166 = vdwg.mxu0
        %v1167 = vxor.u32 %v1089, 2147483648
        %v1168 = vxor.u32 %v1094, 2147483648
        %v1169 = vxor.u32 %v1099, 2147483648
        %v1170 = vxor.u32 %v1104, 2147483648
        %v1171 = vxor.u32 %v1109, 2147483648
        %v1172 = vxor.u32 %v1114, 2147483648
        %v1173 = vxor.u32 %v1119, 2147483648
        %v1174 = vxor.u32 %v1124, 2147483648
        %v1175 = vxor.u32 %v1129, 2147483648
        %v1176 = vxor.u32 %v1134, 2147483648
        %v1177 = vxor.u32 %v1139, 2147483648
        %v1178 = vxor.u32 %v1144, 2147483648
        %v1179 = vxor.u32 %v1149, 2147483648
        %v1180 = vxor.u32 %v1154, 2147483648
        %v1181 = vxor.u32 %v1159, 2147483648
        %v1182 = vxor.u32 %v1164, 2147483648
        %v1183 = vmul.f32 %v1167, 1.442695
        %v1184 = vpow.pop %v1183
        %v1185 = vmul.f32 %v1168, 1.442695
        %v1186 = vpow.pop %v1185
        %v1187 = vmul.f32 %v1169, 1.442695
        %v1188 = vpow.pop %v1187
        %v1189 = vmul.f32 %v1170, 1.442695
        %v1190 = vpow.pop %v1189
        %v1191 = vmul.f32 %v1171, 1.442695
        %v1192 = vpow.pop %v1191
        %v1193 = vmul.f32 %v1172, 1.442695
        %v1194 = vpow.pop %v1193
        %v1195 = vmul.f32 %v1173, 1.442695
        %v1196 = vpow.pop %v1195
        %v1197 = vmul.f32 %v1174, 1.442695
        %v1198 = vpow.pop %v1197
        %v1199 = vmul.f32 %v1175, 1.442695
        %v1200 = vpow.pop %v1199
        %v1201 = vmul.f32 %v1176, 1.442695
        %v1202 = vpow.pop %v1201
        %v1203 = vmul.f32 %v1177, 1.442695
        %v1204 = vpow.pop %v1203
        %v1205 = vmul.f32 %v1178, 1.442695
        %v1206 = vpow.pop %v1205
        %v1207 = vmul.f32 %v1179, 1.442695
        %v1208 = vpow.pop %v1207
        %v1209 = vmul.f32 %v1180, 1.442695
        %v1210 = vpow.pop %v1209
        %v1211 = vmul.f32 %v1181, 1.442695
        %v1212 = vpow.pop %v1211
        %v1213 = vmul.f32 %v1182, 1.442695
        %v1214 = vpow.pop %v1213
        %v1215 = vadd.f32 %v1184, 1.0
        %v1216 = vadd.f32 %v1186, 1.0
        %v1217 = vadd.f32 %v1188, 1.0
        %v1218 = vadd.f32 %v1190, 1.0
        %v1219 = vadd.f32 %v1192, 1.0
        %v1220 = vadd.f32 %v1194, 1.0
        %v1221 = vadd.f32 %v1196, 1.0
        %v1222 = vadd.f32 %v1198, 1.0
        %v1223 = vadd.f32 %v1200, 1.0
        %v1224 = vadd.f32 %v1202, 1.0
        %v1225 = vadd.f32 %v1204, 1.0
        %v1226 = vadd.f32 %v1206, 1.0
        %v1227 = vadd.f32 %v1208, 1.0
        %v1228 = vadd.f32 %v1210, 1.0
        %v1229 = vadd.f32 %v1212, 1.0
        %v1230 = vadd.f32 %v1214, 1.0
        %v1231 = vrcp.pop %v1215
        %v1232 = vmul.f32 1.0, %v1231
        %v1233 = vrcp.pop %v1216
        %v1234 = vmul.f32 1.0, %v1233
        %v1235 = vrcp.pop %v1217
        %v1236 = vmul.f32 1.0, %v1235
        %v1237 = vrcp.pop %v1218
        %v1238 = vmul.f32 1.0, %v1237
        %v1239 = vrcp.pop %v1219
        %v1240 = vmul.f32 1.0, %v1239
        %v1241 = vrcp.pop %v1220
        %v1242 = vmul.f32 1.0, %v1241
        %v1243 = vrcp.pop %v1221
        %v1244 = vmul.f32 1.0, %v1243
        %v1245 = vrcp.pop %v1222
        %v1246 = vmul.f32 1.0, %v1245
        %v1247 = vrcp.pop %v1223
        %v1248 = vmul.f32 1.0, %v1247
        %v1249 = vrcp.pop %v1224
        %v1250 = vmul.f32 1.0, %v1249
        %v1251 = vrcp.pop %v1225
        %v1252 = vmul.f32 1.0, %v1251
        %v1253 = vrcp.pop %v1226
        %v1254 = vmul.f32 1.0, %v1253
        %v1255 = vrcp.pop %v1227
        %v1256 = vmul.f32 1.0, %v1255
        %v1257 = vrcp.pop %v1228
        %v1258 = vmul.f32 1.0, %v1257
        %v1259 = vrcp.pop %v1229
        %v1260 = vmul.f32 1.0, %v1259
        %v1261 = vrcp.pop %v1230
        %v1262 = vmul.f32 1.0, %v1261
        %v1263 = vmul.f32 %v1089, %v1232
        %v1264 = vmul.f32 %v1094, %v1234
        %v1265 = vmul.f32 %v1099, %v1236
        %v1266 = vmul.f32 %v1104, %v1238
        %v1267 = vmul.f32 %v1109, %v1240
        %v1268 = vmul.f32 %v1114, %v1242
        %v1269 = vmul.f32 %v1119, %v1244
        %v1270 = vmul.f32 %v1124, %v1246
        %v1271 = vmul.f32 %v1129, %v1248
        %v1272 = vmul.f32 %v1134, %v1250
        %v1273 = vmul.f32 %v1139, %v1252
        %v1274 = vmul.f32 %v1144, %v1254
        %v1275 = vmul.f32 %v1149, %v1256
        %v1276 = vmul.f32 %v1154, %v1258
        %v1277 = vmul.f32 %v1159, %v1260
        %v1278 = vmul.f32 %v1164, %v1262
        %v1279 = vadd.f32 %v930, %v1263
        %v1280 = vadd.f32 %v931, %v1264
        %v1281 = vadd.f32 %v932, %v1265
        %v1282 = vadd.f32 %v933, %v1266
        %v1283 = vadd.f32 %v934, %v1267
        %v1284 = vadd.f32 %v935, %v1268
        %v1285 = vadd.f32 %v936, %v1269
        %v1286 = vadd.f32 %v937, %v1270
        %v1287 = vadd.f32 %v938, %v1271
        %v1288 = vadd.f32 %v939, %v1272
        %v1289 = vadd.f32 %v940, %v1273
        %v1290 = vadd.f32 %v941, %v1274
        %v1291 = vadd.f32 %v942, %v1275
        %v1292 = vadd.f32 %v943, %v1276
        %v1293 = vadd.f32 %v944, %v1277
        %v1294 = vadd.f32 %v945, %v1278
        %v1295 = vld [vmem:[%s7] sm:$0xff]
        %v1296 = vld [vmem:[%s7 + $0x8] sm:$0xff]
        %v1297 = vld [vmem:[%s7 + $0x10] sm:$0xff]
        %v1298 = vld [vmem:[%s7 + $0x18] sm:$0xff]
        %v1299 = vld [vmem:[%s7 + $0x20] sm:$0xff]
        %v1300 = vld [vmem:[%s7 + $0x28] sm:$0xff]
        %v1301 = vld [vmem:[%s7 + $0x30] sm:$0xff]
        %v1302 = vld [vmem:[%s7 + $0x38] sm:$0xff]
        %v1303 = vld [vmem:[%s7 + $0x40] sm:$0xff]
        %v1304 = vld [vmem:[%s7 + $0x48] sm:$0xff]
        %v1305 = vld [vmem:[%s7 + $0x50] sm:$0xff]
        %v1306 = vld [vmem:[%s7 + $0x58] sm:$0xff]
        %v1307 = vld [vmem:[%s7 + $0x60] sm:$0xff]
        %v1308 = vld [vmem:[%s7 + $0x68] sm:$0xff]
        %v1309 = vld [vmem:[%s7 + $0x70] sm:$0xff]
        %v1310 = vld [vmem:[%s7 + $0x78] sm:$0xff]
        %v1311 = vld [vmem:[%s8] sm:$0x1]
        %v1313 = vlaneseq
        %v1314 = vshrl.u32 %v1313, 7
        %v1315 = vsub.s32 0, %v1314
        %v1316 = vrot.slane %v1311, %v1315
        %1318 = vmatprep.subr.mxu0 0.0
        %1319 = vmatpush1.msra.mxu0 %v1295
        %1320 = vmatprep.subr.mxu0 0.0
        %1321 = vmatpush1.msra.mxu0 %v1296
        %1322 = vmatprep.subr.mxu0 0.0
        %1323 = vmatpush1.msra.mxu0 %v1297
        %1324 = vmatprep.subr.mxu0 0.0
        %1325 = vmatpush1.msra.mxu0 %v1298
        %1326 = vmatprep.subr.mxu0 0.0
        %1327 = vmatpush1.msra.mxu0 %v1299
        %1328 = vmatprep.subr.mxu0 0.0
        %1329 = vmatpush1.msra.mxu0 %v1300
        %1330 = vmatprep.subr.mxu0 0.0
        %1331 = vmatpush1.msra.mxu0 %v1301
        %1332 = vmatprep.subr.mxu0 0.0
        %1333 = vmatpush1.msra.mxu0 %v1302
        %1334 = vmatprep.subr.mxu0 0.0
        %1335 = vmatpush1.msra.mxu0 %v1303
        %1336 = vmatprep.subr.mxu0 0.0
        %1337 = vmatpush1.msra.mxu0 %v1304
        %1338 = vmatprep.subr.mxu0 0.0
        %1339 = vmatpush1.msra.mxu0 %v1305
        %1340 = vmatprep.subr.mxu0 0.0
        %1341 = vmatpush1.msra.mxu0 %v1306
        %1342 = vmatprep.subr.mxu0 0.0
        %1343 = vmatpush1.msra.mxu0 %v1307
        %1344 = vmatprep.subr.mxu0 0.0
        %1345 = vmatpush1.msra.mxu0 %v1308
        %1346 = vmatprep.subr.mxu0 0.0
        %1347 = vmatpush1.msra.mxu0 %v1309
        %1348 = vmatprep.subr.mxu0 0.0
        %1349 = vmatpush1.msra.mxu0 %v1310
        %1350 = vmatprep.subr.mxu0 0.0
        %1351 = vmatpush1.msra.mxu0 0.0
        %1352 = vmatprep.subr.mxu0 0.0
        %1353 = vmatpush1.msra.mxu0 0.0
        %1354 = vmatprep.subr.mxu0 0.0
        %1355 = vmatpush1.msra.mxu0 0.0
        %1356 = vmatprep.subr.mxu0 0.0
        %1357 = vmatpush1.msra.mxu0 0.0
        %1358 = vmatprep.subr.mxu0 0.0
        %1359 = vmatpush1.msra.mxu0 0.0
        %1360 = vmatprep.subr.mxu0 0.0
        %1361 = vmatpush1.msra.mxu0 0.0
        %1362 = vmatprep.subr.mxu0 0.0
        %1363 = vmatpush1.msra.mxu0 0.0
        %1364 = vmatprep.subr.mxu0 0.0
        %1365 = vmatpush1.msra.mxu0 0.0
        %1366 = vmatprep.subr.mxu0 0.0
        %1367 = vmatpush1.msra.mxu0 0.0
        %1368 = vmatprep.subr.mxu0 0.0
        %1369 = vmatpush1.msra.mxu0 0.0
        %1370 = vmatprep.subr.mxu0 0.0
        %1371 = vmatpush1.msra.mxu0 0.0
        %1372 = vmatprep.subr.mxu0 0.0
        %1373 = vmatpush1.msra.mxu0 0.0
        %1374 = vmatprep.subr.mxu0 0.0
        %1375 = vmatpush1.msra.mxu0 0.0
        %1376 = vmatprep.subr.mxu0 0.0
        %1377 = vmatpush1.msra.mxu0 0.0
        %1378 = vmatprep.subr.mxu0 0.0
        %1379 = vmatpush1.msra.mxu0 0.0
        %1380 = vmatprep.subr.mxu0 0.0
        %1381 = vmatpush1.msra.mxu0 0.0
        %1382 = vmatprep.mubr.f32.mxu0 0.0
        %1383 = vmatmul.mubr.f32.gmra.mrb[0].mxu0 %v1279
        %v1384 = vpop.f32.mrb[0].mxu0
        %v1385 = vadd.f32 %v1316, %v1384
        %v1386 = vpop.f32.mrb[0].mxu0
        %1387 = vmatprep.mubr.f32.mxu0 0.0
        %1388 = vmatmul.mubr.f32.gmra.mrb[0].mxu0 %v1280
        %v1389 = vpop.f32.mrb[0].mxu0
        %v1390 = vadd.f32 %v1316, %v1389
        %v1391 = vpop.f32.mrb[0].mxu0
        %1392 = vmatprep.mubr.f32.mxu0 0.0
        %1393 = vmatmul.mubr.f32.gmra.mrb[0].mxu0 %v1281
        %v1394 = vpop.f32.mrb[0].mxu0
        %v1395 = vadd.f32 %v1316, %v1394
        %v1396 = vpop.f32.mrb[0].mxu0
        %1397 = vmatprep.mubr.f32.mxu0 0.0
        %1398 = vmatmul.mubr.f32.gmra.mrb[0].mxu0 %v1282
        %v1399 = vpop.f32.mrb[0].mxu0
        %v1400 = vadd.f32 %v1316, %v1399
        %v1401 = vpop.f32.mrb[0].mxu0
        %1402 = vmatprep.mubr.f32.mxu0 0.0
        %1403 = vmatmul.mubr.f32.gmra.mrb[0].mxu0 %v1283
        %v1404 = vpop.f32.mrb[0].mxu0
        %v1405 = vadd.f32 %v1316, %v1404
        %v1406 = vpop.f32.mrb[0].mxu0
        %1407 = vmatprep.mubr.f32.mxu0 0.0
        %1408 = vmatmul.mubr.f32.gmra.mrb[0].mxu0 %v1284
        %v1409 = vpop.f32.mrb[0].mxu0
        %v1410 = vadd.f32 %v1316, %v1409
        %v1411 = vpop.f32.mrb[0].mxu0
        %1412 = vmatprep.mubr.f32.mxu0 0.0
        %1413 = vmatmul.mubr.f32.gmra.mrb[0].mxu0 %v1285
        %v1414 = vpop.f32.mrb[0].mxu0
        %v1415 = vadd.f32 %v1316, %v1414
        %v1416 = vpop.f32.mrb[0].mxu0
        %1417 = vmatprep.mubr.f32.mxu0 0.0
        %1418 = vmatmul.mubr.f32.gmra.mrb[0].mxu0 %v1286
        %v1419 = vpop.f32.mrb[0].mxu0
        %v1420 = vadd.f32 %v1316, %v1419
        %v1421 = vpop.f32.mrb[0].mxu0
        %1422 = vmatprep.mubr.f32.mxu0 0.0
        %1423 = vmatmul.mubr.f32.gmra.mrb[0].mxu0 %v1287
        %v1424 = vpop.f32.mrb[0].mxu0
        %v1425 = vadd.f32 %v1316, %v1424
        %v1426 = vpop.f32.mrb[0].mxu0
        %1427 = vmatprep.mubr.f32.mxu0 0.0
        %1428 = vmatmul.mubr.f32.gmra.mrb[0].mxu0 %v1288
        %v1429 = vpop.f32.mrb[0].mxu0
        %v1430 = vadd.f32 %v1316, %v1429
        %v1431 = vpop.f32.mrb[0].mxu0
        %1432 = vmatprep.mubr.f32.mxu0 0.0
        %1433 = vmatmul.mubr.f32.gmra.mrb[0].mxu0 %v1289
        %v1434 = vpop.f32.mrb[0].mxu0
        %v1435 = vadd.f32 %v1316, %v1434
        %v1436 = vpop.f32.mrb[0].mxu0
        %1437 = vmatprep.mubr.f32.mxu0 0.0
        %1438 = vmatmul.mubr.f32.gmra.mrb[0].mxu0 %v1290
        %v1439 = vpop.f32.mrb[0].mxu0
        %v1440 = vadd.f32 %v1316, %v1439
        %v1441 = vpop.f32.mrb[0].mxu0
        %1442 = vmatprep.mubr.f32.mxu0 0.0
        %1443 = vmatmul.mubr.f32.gmra.mrb[0].mxu0 %v1291
        %v1444 = vpop.f32.mrb[0].mxu0
        %v1445 = vadd.f32 %v1316, %v1444
        %v1446 = vpop.f32.mrb[0].mxu0
        %1447 = vmatprep.mubr.f32.mxu0 0.0
        %1448 = vmatmul.mubr.f32.gmra.mrb[0].mxu0 %v1292
        %v1449 = vpop.f32.mrb[0].mxu0
        %v1450 = vadd.f32 %v1316, %v1449
        %v1451 = vpop.f32.mrb[0].mxu0
        %1452 = vmatprep.mubr.f32.mxu0 0.0
        %1453 = vmatmul.mubr.f32.gmra.mrb[0].mxu0 %v1293
        %v1454 = vpop.f32.mrb[0].mxu0
        %v1455 = vadd.f32 %v1316, %v1454
        %v1456 = vpop.f32.mrb[0].mxu0
        %1457 = vmatprep.mubr.f32.mxu0 0.0
        %1458 = vmatmul.mubr.f32.gmra.mrb[0].mxu0 %v1294
        %v1459 = vpop.f32.mrb[0].mxu0
        %v1460 = vadd.f32 %v1316, %v1459
        %v1461 = vpop.f32.mrb[0].mxu0
        %1462 = vdwg.mxu0
        %v1463 = vxor.u32 %v1385, 2147483648
        %v1464 = vxor.u32 %v1390, 2147483648
        %v1465 = vxor.u32 %v1395, 2147483648
        %v1466 = vxor.u32 %v1400, 2147483648
        %v1467 = vxor.u32 %v1405, 2147483648
        %v1468 = vxor.u32 %v1410, 2147483648
        %v1469 = vxor.u32 %v1415, 2147483648
        %v1470 = vxor.u32 %v1420, 2147483648
        %v1471 = vxor.u32 %v1425, 2147483648
        %v1472 = vxor.u32 %v1430, 2147483648
        %v1473 = vxor.u32 %v1435, 2147483648
        %v1474 = vxor.u32 %v1440, 2147483648
        %v1475 = vxor.u32 %v1445, 2147483648
        %v1476 = vxor.u32 %v1450, 2147483648
        %v1477 = vxor.u32 %v1455, 2147483648
        %v1478 = vxor.u32 %v1460, 2147483648
        %v1479 = vmul.f32 %v1463, 1.442695
        %v1480 = vpow.pop %v1479
        %v1481 = vmul.f32 %v1464, 1.442695
        %v1482 = vpow.pop %v1481
        %v1483 = vmul.f32 %v1465, 1.442695
        %v1484 = vpow.pop %v1483
        %v1485 = vmul.f32 %v1466, 1.442695
        %v1486 = vpow.pop %v1485
        %v1487 = vmul.f32 %v1467, 1.442695
        %v1488 = vpow.pop %v1487
        %v1489 = vmul.f32 %v1468, 1.442695
        %v1490 = vpow.pop %v1489
        %v1491 = vmul.f32 %v1469, 1.442695
        %v1492 = vpow.pop %v1491
        %v1493 = vmul.f32 %v1470, 1.442695
        %v1494 = vpow.pop %v1493
        %v1495 = vmul.f32 %v1471, 1.442695
        %v1496 = vpow.pop %v1495
        %v1497 = vmul.f32 %v1472, 1.442695
        %v1498 = vpow.pop %v1497
        %v1499 = vmul.f32 %v1473, 1.442695
        %v1500 = vpow.pop %v1499
        %v1501 = vmul.f32 %v1474, 1.442695
        %v1502 = vpow.pop %v1501
        %v1503 = vmul.f32 %v1475, 1.442695
        %v1504 = vpow.pop %v1503
        %v1505 = vmul.f32 %v1476, 1.442695
        %v1506 = vpow.pop %v1505
        %v1507 = vmul.f32 %v1477, 1.442695
        %v1508 = vpow.pop %v1507
        %v1509 = vmul.f32 %v1478, 1.442695
        %v1510 = vpow.pop %v1509
        %v1511 = vadd.f32 %v1480, 1.0
        %v1512 = vadd.f32 %v1482, 1.0
        %v1513 = vadd.f32 %v1484, 1.0
        %v1514 = vadd.f32 %v1486, 1.0
        %v1515 = vadd.f32 %v1488, 1.0
        %v1516 = vadd.f32 %v1490, 1.0
        %v1517 = vadd.f32 %v1492, 1.0
        %v1518 = vadd.f32 %v1494, 1.0
        %v1519 = vadd.f32 %v1496, 1.0
        %v1520 = vadd.f32 %v1498, 1.0
        %v1521 = vadd.f32 %v1500, 1.0
        %v1522 = vadd.f32 %v1502, 1.0
        %v1523 = vadd.f32 %v1504, 1.0
        %v1524 = vadd.f32 %v1506, 1.0
        %v1525 = vadd.f32 %v1508, 1.0
        %v1526 = vadd.f32 %v1510, 1.0
        %v1527 = vrcp.pop %v1511
        %v1528 = vmul.f32 1.0, %v1527
        %v1529 = vrcp.pop %v1512
        %v1530 = vmul.f32 1.0, %v1529
        %v1531 = vrcp.pop %v1513
        %v1532 = vmul.f32 1.0, %v1531
        %v1533 = vrcp.pop %v1514
        %v1534 = vmul.f32 1.0, %v1533
        %v1535 = vrcp.pop %v1515
        %v1536 = vmul.f32 1.0, %v1535
        %v1537 = vrcp.pop %v1516
        %v1538 = vmul.f32 1.0, %v1537
        %v1539 = vrcp.pop %v1517
        %v1540 = vmul.f32 1.0, %v1539
        %v1541 = vrcp.pop %v1518
        %v1542 = vmul.f32 1.0, %v1541
        %v1543 = vrcp.pop %v1519
        %v1544 = vmul.f32 1.0, %v1543
        %v1545 = vrcp.pop %v1520
        %v1546 = vmul.f32 1.0, %v1545
        %v1547 = vrcp.pop %v1521
        %v1548 = vmul.f32 1.0, %v1547
        %v1549 = vrcp.pop %v1522
        %v1550 = vmul.f32 1.0, %v1549
        %v1551 = vrcp.pop %v1523
        %v1552 = vmul.f32 1.0, %v1551
        %v1553 = vrcp.pop %v1524
        %v1554 = vmul.f32 1.0, %v1553
        %v1555 = vrcp.pop %v1525
        %v1556 = vmul.f32 1.0, %v1555
        %v1557 = vrcp.pop %v1526
        %v1558 = vmul.f32 1.0, %v1557
        %v1559 = vmul.f32 %v1385, %v1528
        %v1560 = vmul.f32 %v1390, %v1530
        %v1561 = vmul.f32 %v1395, %v1532
        %v1562 = vmul.f32 %v1400, %v1534
        %v1563 = vmul.f32 %v1405, %v1536
        %v1564 = vmul.f32 %v1410, %v1538
        %v1565 = vmul.f32 %v1415, %v1540
        %v1566 = vmul.f32 %v1420, %v1542
        %v1567 = vmul.f32 %v1425, %v1544
        %v1568 = vmul.f32 %v1430, %v1546
        %v1569 = vmul.f32 %v1435, %v1548
        %v1570 = vmul.f32 %v1440, %v1550
        %v1571 = vmul.f32 %v1445, %v1552
        %v1572 = vmul.f32 %v1450, %v1554
        %v1573 = vmul.f32 %v1455, %v1556
        %v1574 = vmul.f32 %v1460, %v1558
        %1575 = vadd.xlane.f32.xlu0 %v1559
        %v1576 = vpop.xlane.xlu0 %1575
        %1577 = vadd.xlane.f32.xlu0 %v1560
        %v1578 = vpop.xlane.xlu0 %1577
        %1579 = vadd.xlane.f32.xlu0 %v1561
        %v1580 = vpop.xlane.xlu0 %1579
        %1581 = vadd.xlane.f32.xlu0 %v1562
        %v1582 = vpop.xlane.xlu0 %1581
        %1583 = vadd.xlane.f32.xlu0 %v1563
        %v1584 = vpop.xlane.xlu0 %1583
        %1585 = vadd.xlane.f32.xlu0 %v1564
        %v1586 = vpop.xlane.xlu0 %1585
        %1587 = vadd.xlane.f32.xlu0 %v1565
        %v1588 = vpop.xlane.xlu0 %1587
        %1589 = vadd.xlane.f32.xlu0 %v1566
        %v1590 = vpop.xlane.xlu0 %1589
        %1591 = vadd.xlane.f32.xlu0 %v1567
        %v1592 = vpop.xlane.xlu0 %1591
        %1593 = vadd.xlane.f32.xlu0 %v1568
        %v1594 = vpop.xlane.xlu0 %1593
        %1595 = vadd.xlane.f32.xlu0 %v1569
        %v1596 = vpop.xlane.xlu0 %1595
        %1597 = vadd.xlane.f32.xlu0 %v1570
        %v1598 = vpop.xlane.xlu0 %1597
        %1599 = vadd.xlane.f32.xlu0 %v1571
        %v1600 = vpop.xlane.xlu0 %1599
        %1601 = vadd.xlane.f32.xlu0 %v1572
        %v1602 = vpop.xlane.xlu0 %1601
        %1603 = vadd.xlane.f32.xlu0 %v1573
        %v1604 = vpop.xlane.xlu0 %1603
        %1605 = vadd.xlane.f32.xlu0 %v1574
        %v1606 = vpop.xlane.xlu0 %1605
        %v1607 = vmul.f32 %v1576, 0.03125
        %v1608 = vmul.f32 %v1578, 0.03125
        %v1609 = vmul.f32 %v1580, 0.03125
        %v1610 = vmul.f32 %v1582, 0.03125
        %v1611 = vmul.f32 %v1584, 0.03125
        %v1612 = vmul.f32 %v1586, 0.03125
        %v1613 = vmul.f32 %v1588, 0.03125
        %v1614 = vmul.f32 %v1590, 0.03125
        %v1615 = vmul.f32 %v1592, 0.03125
        %v1616 = vmul.f32 %v1594, 0.03125
        %v1617 = vmul.f32 %v1596, 0.03125
        %v1618 = vmul.f32 %v1598, 0.03125
        %v1619 = vmul.f32 %v1600, 0.03125
        %v1620 = vmul.f32 %v1602, 0.03125
        %v1621 = vmul.f32 %v1604, 0.03125
        %v1622 = vmul.f32 %v1606, 0.03125
        %v1623 = vmul.f32 %v1559, %v1559
        %v1624 = vmul.f32 %v1560, %v1560
        %v1625 = vmul.f32 %v1561, %v1561
        %v1626 = vmul.f32 %v1562, %v1562
        %v1627 = vmul.f32 %v1563, %v1563
        %v1628 = vmul.f32 %v1564, %v1564
        %v1629 = vmul.f32 %v1565, %v1565
        %v1630 = vmul.f32 %v1566, %v1566
        %v1631 = vmul.f32 %v1567, %v1567
        %v1632 = vmul.f32 %v1568, %v1568
        %v1633 = vmul.f32 %v1569, %v1569
        %v1634 = vmul.f32 %v1570, %v1570
        %v1635 = vmul.f32 %v1571, %v1571
        %v1636 = vmul.f32 %v1572, %v1572
        %v1637 = vmul.f32 %v1573, %v1573
        %v1638 = vmul.f32 %v1574, %v1574
        %1639 = vadd.xlane.f32.xlu0 %v1623
        %v1640 = vpop.xlane.xlu0 %1639
        %1641 = vadd.xlane.f32.xlu0 %v1624
        %v1642 = vpop.xlane.xlu0 %1641
        %1643 = vadd.xlane.f32.xlu0 %v1625
        %v1644 = vpop.xlane.xlu0 %1643
        %1645 = vadd.xlane.f32.xlu0 %v1626
        %v1646 = vpop.xlane.xlu0 %1645
        %1647 = vadd.xlane.f32.xlu0 %v1627
        %v1648 = vpop.xlane.xlu0 %1647
        %1649 = vadd.xlane.f32.xlu0 %v1628
        %v1650 = vpop.xlane.xlu0 %1649
        %1651 = vadd.xlane.f32.xlu0 %v1629
        %v1652 = vpop.xlane.xlu0 %1651
        %1653 = vadd.xlane.f32.xlu0 %v1630
        %v1654 = vpop.xlane.xlu0 %1653
        %1655 = vadd.xlane.f32.xlu0 %v1631
        %v1656 = vpop.xlane.xlu0 %1655
        %1657 = vadd.xlane.f32.xlu0 %v1632
        %v1658 = vpop.xlane.xlu0 %1657
        %1659 = vadd.xlane.f32.xlu0 %v1633
        %v1660 = vpop.xlane.xlu0 %1659
        %1661 = vadd.xlane.f32.xlu0 %v1634
        %v1662 = vpop.xlane.xlu0 %1661
        %1663 = vadd.xlane.f32.xlu0 %v1635
        %v1664 = vpop.xlane.xlu0 %1663
        %1665 = vadd.xlane.f32.xlu0 %v1636
        %v1666 = vpop.xlane.xlu0 %1665
        %1667 = vadd.xlane.f32.xlu0 %v1637
        %v1668 = vpop.xlane.xlu0 %1667
        %1669 = vadd.xlane.f32.xlu0 %v1638
        %v1670 = vpop.xlane.xlu0 %1669
        %v1671 = vmul.f32 %v1640, 0.03125
        %v1672 = vmul.f32 %v1642, 0.03125
        %v1673 = vmul.f32 %v1644, 0.03125
        %v1674 = vmul.f32 %v1646, 0.03125
        %v1675 = vmul.f32 %v1648, 0.03125
        %v1676 = vmul.f32 %v1650, 0.03125
        %v1677 = vmul.f32 %v1652, 0.03125
        %v1678 = vmul.f32 %v1654, 0.03125
        %v1679 = vmul.f32 %v1656, 0.03125
        %v1680 = vmul.f32 %v1658, 0.03125
        %v1681 = vmul.f32 %v1660, 0.03125
        %v1682 = vmul.f32 %v1662, 0.03125
        %v1683 = vmul.f32 %v1664, 0.03125
        %v1684 = vmul.f32 %v1666, 0.03125
        %v1685 = vmul.f32 %v1668, 0.03125
        %v1686 = vmul.f32 %v1670, 0.03125
        %v1687 = vmul.f32 %v1607, %v1607
        %v1688 = vmul.f32 %v1608, %v1608
        %v1689 = vmul.f32 %v1609, %v1609
        %v1690 = vmul.f32 %v1610, %v1610
        %v1691 = vmul.f32 %v1611, %v1611
        %v1692 = vmul.f32 %v1612, %v1612
        %v1693 = vmul.f32 %v1613, %v1613
        %v1694 = vmul.f32 %v1614, %v1614
        %v1695 = vmul.f32 %v1615, %v1615
        %v1696 = vmul.f32 %v1616, %v1616
        %v1697 = vmul.f32 %v1617, %v1617
        %v1698 = vmul.f32 %v1618, %v1618
        %v1699 = vmul.f32 %v1619, %v1619
        %v1700 = vmul.f32 %v1620, %v1620
        %v1701 = vmul.f32 %v1621, %v1621
        %v1702 = vmul.f32 %v1622, %v1622
        %v1703 = vsub.f32 %v1671, %v1687
        %v1704 = vsub.f32 %v1672, %v1688
        %v1705 = vsub.f32 %v1673, %v1689
        %v1706 = vsub.f32 %v1674, %v1690
        %v1707 = vsub.f32 %v1675, %v1691
        %v1708 = vsub.f32 %v1676, %v1692
        %v1709 = vsub.f32 %v1677, %v1693
        %v1710 = vsub.f32 %v1678, %v1694
        %v1711 = vsub.f32 %v1679, %v1695
        %v1712 = vsub.f32 %v1680, %v1696
        %v1713 = vsub.f32 %v1681, %v1697
        %v1714 = vsub.f32 %v1682, %v1698
        %v1715 = vsub.f32 %v1683, %v1699
        %v1716 = vsub.f32 %v1684, %v1700
        %v1717 = vsub.f32 %v1685, %v1701
        %v1718 = vsub.f32 %v1686, %v1702
        %v1719 = vsub.f32 %v1559, %v1607
        %v1720 = vsub.f32 %v1560, %v1608
        %v1721 = vsub.f32 %v1561, %v1609
        %v1722 = vsub.f32 %v1562, %v1610
        %v1723 = vsub.f32 %v1563, %v1611
        %v1724 = vsub.f32 %v1564, %v1612
        %v1725 = vsub.f32 %v1565, %v1613
        %v1726 = vsub.f32 %v1566, %v1614
        %v1727 = vsub.f32 %v1567, %v1615
        %v1728 = vsub.f32 %v1568, %v1616
        %v1729 = vsub.f32 %v1569, %v1617
        %v1730 = vsub.f32 %v1570, %v1618
        %v1731 = vsub.f32 %v1571, %v1619
        %v1732 = vsub.f32 %v1572, %v1620
        %v1733 = vsub.f32 %v1573, %v1621
        %v1734 = vsub.f32 %v1574, %v1622
        %v1735 = vadd.f32 %v1703, 1e-05
        %v1736 = vadd.f32 %v1704, 1e-05
        %v1737 = vadd.f32 %v1705, 1e-05
        %v1738 = vadd.f32 %v1706, 1e-05
        %v1739 = vadd.f32 %v1707, 1e-05
        %v1740 = vadd.f32 %v1708, 1e-05
        %v1741 = vadd.f32 %v1709, 1e-05
        %v1742 = vadd.f32 %v1710, 1e-05
        %v1743 = vadd.f32 %v1711, 1e-05
        %v1744 = vadd.f32 %v1712, 1e-05
        %v1745 = vadd.f32 %v1713, 1e-05
        %v1746 = vadd.f32 %v1714, 1e-05
        %v1747 = vadd.f32 %v1715, 1e-05
        %v1748 = vadd.f32 %v1716, 1e-05
        %v1749 = vadd.f32 %v1717, 1e-05
        %v1750 = vadd.f32 %v1718, 1e-05
        %v1751 = vrsqrt.pop %v1735
        %v1752 = vrsqrt.pop %v1736
        %v1753 = vrsqrt.pop %v1737
        %v1754 = vrsqrt.pop %v1738
        %v1755 = vrsqrt.pop %v1739
        %v1756 = vrsqrt.pop %v1740
        %v1757 = vrsqrt.pop %v1741
        %v1758 = vrsqrt.pop %v1742
        %v1759 = vrsqrt.pop %v1743
        %v1760 = vrsqrt.pop %v1744
        %v1761 = vrsqrt.pop %v1745
        %v1762 = vrsqrt.pop %v1746
        %v1763 = vrsqrt.pop %v1747
        %v1764 = vrsqrt.pop %v1748
        %v1765 = vrsqrt.pop %v1749
        %v1766 = vrsqrt.pop %v1750
        %v1767 = vmul.f32 %v1719, %v1751
        %v1768 = vmul.f32 %v1720, %v1752
        %v1769 = vmul.f32 %v1721, %v1753
        %v1770 = vmul.f32 %v1722, %v1754
        %v1771 = vmul.f32 %v1723, %v1755
        %v1772 = vmul.f32 %v1724, %v1756
        %v1773 = vmul.f32 %v1725, %v1757
        %v1774 = vmul.f32 %v1726, %v1758
        %v1775 = vmul.f32 %v1727, %v1759
        %v1776 = vmul.f32 %v1728, %v1760
        %v1777 = vmul.f32 %v1729, %v1761
        %v1778 = vmul.f32 %v1730, %v1762
        %v1779 = vmul.f32 %v1731, %v1763
        %v1780 = vmul.f32 %v1732, %v1764
        %v1781 = vmul.f32 %v1733, %v1765
        %v1782 = vmul.f32 %v1734, %v1766
        %v1783 = vld [vmem:[%s9] sm:$0x1]
        %v1785 = vlaneseq
        %v1786 = vshrl.u32 %v1785, 7
        %v1787 = vsub.s32 0, %v1786
        %v1788 = vrot.slane %v1783, %v1787
        %v1790 = vmul.f32 %v1767, %v1788
        %v1791 = vmul.f32 %v1768, %v1788
        %v1792 = vmul.f32 %v1769, %v1788
        %v1793 = vmul.f32 %v1770, %v1788
        %v1794 = vmul.f32 %v1771, %v1788
        %v1795 = vmul.f32 %v1772, %v1788
        %v1796 = vmul.f32 %v1773, %v1788
        %v1797 = vmul.f32 %v1774, %v1788
        %v1798 = vmul.f32 %v1775, %v1788
        %v1799 = vmul.f32 %v1776, %v1788
        %v1800 = vmul.f32 %v1777, %v1788
        %v1801 = vmul.f32 %v1778, %v1788
        %v1802 = vmul.f32 %v1779, %v1788
        %v1803 = vmul.f32 %v1780, %v1788
        %v1804 = vmul.f32 %v1781, %v1788
        %v1805 = vmul.f32 %v1782, %v1788
        %v1806 = vld [vmem:[%s10] sm:$0x1]
        %v1808 = vlaneseq
        %v1809 = vshrl.u32 %v1808, 7
        %v1810 = vsub.s32 0, %v1809
        %v1811 = vrot.slane %v1806, %v1810
        %v1813 = vadd.f32 %v1790, %v1811
        %v1814 = vadd.f32 %v1791, %v1811
        %v1815 = vadd.f32 %v1792, %v1811
        %v1816 = vadd.f32 %v1793, %v1811
        %v1817 = vadd.f32 %v1794, %v1811
        %v1818 = vadd.f32 %v1795, %v1811
        %v1819 = vadd.f32 %v1796, %v1811
        %v1820 = vadd.f32 %v1797, %v1811
        %v1821 = vadd.f32 %v1798, %v1811
        %v1822 = vadd.f32 %v1799, %v1811
        %v1823 = vadd.f32 %v1800, %v1811
        %v1824 = vadd.f32 %v1801, %v1811
        %v1825 = vadd.f32 %v1802, %v1811
        %v1826 = vadd.f32 %v1803, %v1811
        %v1827 = vadd.f32 %v1804, %v1811
        %v1828 = vadd.f32 %v1805, %v1811
        %1829 = vst [vmem:[%s429] sm:$0xff] %v1813
        %1830 = vst [vmem:[%s429 + $0x8] sm:$0xff] %v1814
        %1831 = vst [vmem:[%s429 + $0x10] sm:$0xff] %v1815
        %1832 = vst [vmem:[%s429 + $0x18] sm:$0xff] %v1816
        %1833 = vst [vmem:[%s429 + $0x20] sm:$0xff] %v1817
        %1834 = vst [vmem:[%s429 + $0x28] sm:$0xff] %v1818
        %1835 = vst [vmem:[%s429 + $0x30] sm:$0xff] %v1819
        %1836 = vst [vmem:[%s429 + $0x38] sm:$0xff] %v1820
        %1837 = vst [vmem:[%s429 + $0x40] sm:$0xff] %v1821
        %1838 = vst [vmem:[%s429 + $0x48] sm:$0xff] %v1822
        %1839 = vst [vmem:[%s429 + $0x50] sm:$0xff] %v1823
        %1840 = vst [vmem:[%s429 + $0x58] sm:$0xff] %v1824
        %1841 = vst [vmem:[%s429 + $0x60] sm:$0xff] %v1825
        %1842 = vst [vmem:[%s429 + $0x68] sm:$0xff] %v1826
        %1843 = vst [vmem:[%s429 + $0x70] sm:$0xff] %v1827
        %1844 = vst [vmem:[%s429 + $0x78] sm:$0xff] %v1828
        %s1845 = sand.u32 %s280, 1
        %s1846 = scalar_lea.sflag [#allocation4], %s1845
        %s1847 = sand.u32 %s280, 1
        %s1848 = smul.addr %s1847, 128
        %s1849 = scalar_lea.vmem [#allocation5], %s1848
        // Predicated region
        $region69: #{tpu_custom_call.1} parent=63 // pred_check
          %p1850 = pneg %p290
        $region70: #{tpu_custom_call.1} parent=63 // pred_check_branch
          %1852 = sbr.rel (%p1850) target = $region72
        $region71: #{tpu_custom_call.1} parent=63 // pred_region
          %s1853 = smul.u32 16, %s26
          %s1855 = ssub.s32 2048, 2048
          %1856 = vsyncadd %s1846, %s1855
          %s1857 = smul.addr %s1853, 128
          %s1858 = scalar_lea.hbm %s11, %s1857
          %s1859 = sshll.u32 %s1849, 4
          %s1860 = int_to_ptr.vmem [resolvable:$true] %s1859
          %1865 = dma.vmem_to_hbm [thread:$0]  %s1860, 2048, %s1858, %s1846, 128, 128, 8
        $region72: #{tpu_custom_call.1} parent=63 // pred_fallthru
          _
      $region64: #{tpu_custom_call.1} parent=5 // pred_fallthru
        _
      %p1866 = scmp.le.s32.totalorder 2, %s21
      // Predicated region
      $region73: #{tpu_custom_call.1} parent=5 // pred_check
        %p1867 = pneg %p1866
      $region74: #{tpu_custom_call.1} parent=5 // pred_check_branch
        %1869 = sbr.rel (%p1867) target = $region76
      $region75: #{tpu_custom_call.1} parent=5 // pred_region
        %s1870 = ssub.s32 %s21, 2
        // Predicated region
        $region77: #{tpu_custom_call.1} parent=75 // pred_check
          %p1871 = pneg %p296
        $region78: #{tpu_custom_call.1} parent=75 // pred_check_branch
          %1873 = sbr.rel (%p1871) target = $region80
        $region79: #{tpu_custom_call.1} parent=75 // pred_region
          %s1874 = sand.u32 %s281, 1
          %s1875 = scalar_lea.sflag [#allocation4], %s1874
          %s1876 = sand.u32 %s281, 1
          %s1877 = smul.addr %s1876, 128
          %s1878 = scalar_lea.vmem [#allocation5], %s1877
          %1879 = dma.done %s1875, 2048
        $region80: #{tpu_custom_call.1} parent=75 // pred_fallthru
          _
      $region76: #{tpu_custom_call.1} parent=5 // pred_fallthru
        _
    $region6: #{tpu_custom_call.1} parent=1 // loop_footer
      %s25 = sadd.s32 1, %s21
    $region7: #{tpu_custom_call.1} parent=1 // loop_footer_branch
      %20 = sbr.rel target = $region3
    $region8: #{tpu_custom_call.1} parent=1 // loop_exit
      _
    %1880 = vsyncpa [#allocation3], 1
    %s1881 = scalar_lea.sflag [#allocation3], 1
    %1882 = vsyncpa %s1881, 1
    %1883 = vsyncpa [#allocation4], 1
    %s1884 = scalar_lea.sflag [#allocation4], 1
    %1885 = vsyncpa %s1884, 1

</llo_original>
